<compile_context>
chip_gen: v6e
topology: v6e:2x2x1
jax: 0.10.0
libtpu: 0.0.40
codegen_flags: <defaults>
</compile_context>

<pallas_src>
import math

import numpy as np
import jax
import jax.numpy as jnp
from jax.experimental import pallas as pl
from jax.experimental.pallas import tpu as pltpu


# --------------------------------------------------------------------------
# Vote mask construction (host-side precompute, mirrors makeVoteMaskStatic).
# --------------------------------------------------------------------------
def _scatter_result_np(inp, dim):
    H, W = inp.shape
    res = np.zeros((H, W, inp.shape[dim]), dtype=np.float64)
    fl = np.floor(inp).astype(np.int64)
    ce = np.ceil(inp).astype(np.int64)
    frac = inp - fl
    ii, jj = np.meshgrid(np.arange(H), np.arange(W), indexing="ij")
    if dim == 0:
        np.add.at(res, (fl, jj, ii), 1.0 - frac)
        np.add.at(res, (ce, jj, ii), frac)
    else:
        np.add.at(res, (ii, fl, jj), 1.0 - frac)
        np.add.at(res, (ii, ce, jj), frac)
    return res


def make_vote_masks(H, W):
    h2, w2 = (H - 1) / 2.0, (W - 1) / 2.0
    rX = np.arange(W, dtype=np.float64)
    rY = np.arange(H, dtype=np.float64)
    lr_mat = (np.abs(w2 - rX) / w2)[None, :] * (rY - h2)[:, None] + h2
    lr_res = _scatter_result_np(lr_mat, 0)                        # (H, W, H)
    l_res = np.concatenate(
        [lr_res[:, : math.ceil(W / 2)], np.zeros((H, W // 2, H))], axis=1)
    r_res = np.concatenate(
        [np.zeros((H, W // 2, H)), lr_res[:, W // 2:]], axis=1)
    ud_mat = (np.abs(h2 - rY) / h2)[:, None] * (rX - w2)[None, :] + w2
    ud_res = _scatter_result_np(ud_mat, 1)                        # (H, W, W)
    h2f, h2c = H // 2, math.ceil(H / 2)
    up = np.concatenate(
        [l_res[:h2c, :, 1:h2f][:, :, ::-1], ud_res[:h2c], r_res[:h2c, :, 1:h2f]],
        axis=2)
    down = np.concatenate(
        [r_res[h2f:, :, h2c:-1], ud_res[h2f:][:, :, ::-1],
         l_res[h2f:, :, h2c:-1][:, :, ::-1]], axis=2)
    up = np.concatenate(
        [up.astype(np.float32), np.zeros((h2f,) + up.shape[1:], np.float32)],
        axis=0)
    down = np.concatenate(
        [np.zeros((h2f,) + down.shape[1:], np.float32), down.astype(np.float32)],
        axis=0)
    return (up.reshape(-1, up.shape[-1]).copy(),
            down.reshape(-1, down.shape[-1]).copy())


# --------------------------------------------------------------------------
# Fused Pallas kernel: conv1(x4) -> votes -> conv2 stacks, one batch per step.
# --------------------------------------------------------------------------
def fused_kernel(x_ref, w1_ref, s1_ref, b1_ref,
                 selx_ref, sely_ref, vup_ref, vdn_ref,
                 wa_ref, sa_ref, ba_ref, wb_ref, sb_ref, bb_ref,
                 mask_ref, o_ref):
    D4, Lp = o_ref.shape          # 4*dim channels, lane-padded length
    D = D4 // 4

    # ---- Stage 1: all four 1x1 conv + folded-BN + ReLU branches, one matmul.
    f = jnp.dot(w1_ref[...], x_ref[...], preferred_element_type=jnp.float32)
    f = jnp.maximum(f * s1_ref[...] + b1_ref[...], 0.0)           # (4D, HW) f32
    f = f.astype(jnp.bfloat16)

    # ---- Stage 2: vote matmuls; results stay in vregs, branches stacked on
    # sublanes: [0:D)=x (sum over H), [D:2D)=y (sum over W), [2D:3D)=cup,
    # [3D:4D)=cdown.  The selector / vote matrices are zero-padded to Lp, so
    # padded lanes come out exactly zero.
    hx = jnp.dot(f[0 * D:1 * D, :], selx_ref[...],
                 preferred_element_type=jnp.float32)
    hy = jnp.dot(f[1 * D:2 * D, :], sely_ref[...],
                 preferred_element_type=jnp.float32)
    hcu = jnp.dot(f[2 * D:3 * D, :], vup_ref[...],
                  preferred_element_type=jnp.float32)
    hcd = jnp.dot(f[3 * D:4 * D, :], vdn_ref[...],
                  preferred_element_type=jnp.float32)
    u = jnp.concatenate([hx, hy, hcu, hcd], axis=0)               # (4D, Lp) f32

    lane = jax.lax.broadcasted_iota(jnp.int32, (D4, Lp), 1)

    # ---- Stage 3: two (3,1) conv + folded-BN + ReLU layers for all branches.
    # Shift-by-one via XLU roll + boundary masking; the three taps and the
    # four branches are fused into one block-diagonal (4D, 12D) matmul.
    def layer(u, w_ref, s_ref, b_ref):
        um1 = jnp.where(lane == 0, 0.0, pltpu.roll(u, 1, 1))            # u[h-1]
        up1 = jnp.where(lane == Lp - 1, 0.0, pltpu.roll(u, Lp - 1, 1))  # u[h+1]
        u3 = jnp.concatenate([um1, u, up1], axis=0).astype(jnp.bfloat16)
        y = jnp.dot(w_ref[...], u3, preferred_element_type=jnp.float32)
        return jnp.maximum(y * s_ref[...] + b_ref[...], 0.0)

    # Re-zero padded lanes between layers so the second layer's shifts do not
    # pull garbage across each branch's valid length.
    h1 = layer(u, wa_ref, sa_ref, ba_ref) * mask_ref[...]
    o_ref[...] = layer(h1, wb_ref, sb_ref, bb_ref)


def _full_spec(a):
    return pl.BlockSpec(a.shape, lambda b: (0,) * a.ndim)


# --------------------------------------------------------------------------
# One-time operand packing (hoisted out of the steady-state forward).
# --------------------------------------------------------------------------
def pack_operands(params, vup, vdn, H, W):
    D = params["w1"].shape[1]
    C = params["w1"].shape[2]
    K = vup.shape[1]
    HW = H * W
    Lp = ((max(H, W, K) + 127) // 128) * 128      # lane-dense padded length

    w1 = params["w1"].reshape(4 * D, C).astype(jnp.bfloat16)
    s1 = params["s1"].reshape(4 * D, 1)
    b1 = params["t1"].reshape(4 * D, 1)

    # Sum-over-H / sum-over-W selectors + Hough vote masks, zero-padded to Lp.
    n = jnp.arange(HW)
    selx = jnp.zeros((HW, Lp), jnp.float32).at[n, n % W].set(1.0).astype(jnp.bfloat16)
    sely = jnp.zeros((HW, Lp), jnp.float32).at[n, n // W].set(1.0).astype(jnp.bfloat16)
    vup_p = jnp.zeros((HW, Lp), jnp.float32).at[:, :K].set(vup).astype(jnp.bfloat16)
    vdn_p = jnp.zeros((HW, Lp), jnp.float32).at[:, :K].set(vdn).astype(jnp.bfloat16)

    # conv2 weights: block-diagonal over branches, taps stacked on contraction.
    names = ("x", "y", "cup", "cdown")

    def blk_diag(mats):
        z = jnp.zeros_like(mats[0])
        rows = [jnp.concatenate([mats[j] if j == i else z for j in range(4)], axis=1)
                for i in range(4)]
        return jnp.concatenate(rows, axis=0)                       # (4D, 4D)

    def build(wk, sk, tk):
        taps = [blk_diag([params["c2"][nm][wk][t] for nm in names]) for t in range(3)]
        w = jnp.concatenate(taps, axis=1).astype(jnp.bfloat16)     # (4D, 12D)
        s = jnp.concatenate([params["c2"][nm][sk] for nm in names])[:, None]
        b = jnp.concatenate([params["c2"][nm][tk] for nm in names])[:, None]
        return w, s, b

    wa, sa, ba = build("wa", "sa", "ta")
    wb, sb, bb = build("wb", "sb", "tb")

    # Valid-lane mask per branch (lengths W, H, K, K).
    lane = jnp.arange(Lp)
    valid = jnp.concatenate([
        jnp.tile((lane < W).astype(jnp.float32)[None, :], (D, 1)),
        jnp.tile((lane < H).astype(jnp.float32)[None, :], (D, 1)),
        jnp.tile((lane < K).astype(jnp.float32)[None, :], (2 * D, 1)),
    ], axis=0)                                                      # (4D, Lp)

    return {"w1": w1, "s1": s1, "b1": b1,
            "selx": selx, "sely": sely, "vup": vup_p, "vdn": vdn_p,
            "wa": wa, "sa": sa, "ba": ba, "wb": wb, "sb": sb, "bb": bb,
            "valid": valid}


# --------------------------------------------------------------------------
# Wrapper: single pallas_call over the batch grid, output split in glue.
# --------------------------------------------------------------------------
def pallas_forward(pers, ops, pers_h, K):
    B, C, H, W = pers.shape
    assert H == W == pers_h, "module's reshape(-1, pers_h) implies H == W == pers_h"
    D4 = ops["w1"].shape[0]
    D = D4 // 4
    HW = H * W
    Lp = ops["selx"].shape[1]

    x_flat = pers.reshape(B, C, HW).astype(jnp.bfloat16)

    order = ("w1", "s1", "b1", "selx", "sely", "vup", "vdn",
             "wa", "sa", "ba", "wb", "sb", "bb", "valid")
    operands = [ops[k] for k in order]

    out = pl.pallas_call(
        fused_kernel,
        out_shape=jax.ShapeDtypeStruct((B, D4, Lp), jnp.float32),
        grid=(B,),
        in_specs=[pl.BlockSpec((None, C, HW), lambda b: (b, 0, 0))]
                 + [_full_spec(a) for a in operands],
        out_specs=pl.BlockSpec((None, D4, Lp), lambda b: (b, 0, 0)),
        compiler_params=pltpu.CompilerParams(
            dimension_semantics=("parallel",)),
    )(x_flat, *operands)

    ox = out[:, 0 * D:1 * D, :pers_h]
    oy = out[:, 1 * D:2 * D, :pers_h]
    ocu = out[:, 2 * D:3 * D, :K]
    ocd = out[:, 3 * D:4 * D, :K]
    hough_feat = jnp.stack([ox, oy], axis=-1)        # (B, dim, pers_h, 2)
    hough_feat_cud = jnp.stack([ocu, ocd], axis=-1)  # (B, dim, K, 2)
    return hough_feat, hough_feat_cud


pallas_forward_jit = jax.jit(pallas_forward, static_argnames=("pers_h", "K"))


# --------------------------------------------------------------------------
# Parameter setup (deterministic, BN folded in inference mode).
# --------------------------------------------------------------------------
def _fold_bn(conv_b, g, b, m, v, eps=1e-5):
    s = g / jnp.sqrt(v + eps)
    return s, s * (conv_b - m) + b


def init_params(key, C, D):
    keys = iter(jax.random.split(key, 128))

    def nrm(shape, scale=0.1):
        return scale * jax.random.normal(next(keys), shape, jnp.float32)

    def bn(n):
        g = jax.random.uniform(next(keys), (n,), jnp.float32, 0.5, 1.5)
        b = 0.1 * jax.random.normal(next(keys), (n,), jnp.float32)
        m = 0.1 * jax.random.normal(next(keys), (n,), jnp.float32)
        v = jax.random.uniform(next(keys), (n,), jnp.float32, 0.5, 1.5)
        return g, b, m, v

    w1s, s1s, t1s = [], [], []
    for _ in range(4):                       # branch order: x, y, cup, cdown
        w = nrm((D, C))
        cb = nrm((D,))
        s, t = _fold_bn(cb, *bn(D))
        w1s.append(w); s1s.append(s); t1s.append(t)

    c2 = {}
    for name in ("x", "y", "cup", "cdown"):
        bp = {}
        for lyr in ("a", "b"):               # two conv(3,1)+BN+ReLU layers
            w = nrm((3, D, D))               # [kh, out, in]
            cb = nrm((D,))
            s, t = _fold_bn(cb, *bn(D))
            bp["w" + lyr] = w
            bp["s" + lyr] = s
            bp["t" + lyr] = t
        c2[name] = bp

    return {"w1": jnp.stack(w1s), "s1": jnp.stack(s1s),
            "t1": jnp.stack(t1s), "c2": c2}


# --------------------------------------------------------------------------
# Pure-JAX reference (f32, HIGHEST precision) for correctness check.
# --------------------------------------------------------------------------
def reference_forward(pers, params, vup, vdn):
    B, C, H, W = pers.shape
    D = params["w1"].shape[1]
    hp = jax.lax.Precision.HIGHEST
    x = pers.reshape(B, C, H * W)

    def c1(i):
        f = jnp.einsum("dc,bcn->bdn", params["w1"][i], x, precision=hp)
        return jnp.maximum(
            f * params["s1"][i][None, :, None] + params["t1"][i][None, :, None],
            0.0)

    fx, fy, fcu, fcd = c1(0), c1(1), c1(2), c1(3)
    hx = fx.reshape(B, D, H, W).sum(axis=2)
    hy = fy.reshape(B, D, H, W).sum(axis=3)
    hcu = jnp.einsum("bdn,nk->bdk", fcu, vup, precision=hp)
    hcd = jnp.einsum("bdn,nk->bdk", fcd, vdn, precision=hp)

    def layer(u, w, s, t):
        um1 = jnp.pad(u, ((0, 0), (0, 0), (1, 0)))[:, :, :-1]
        up1 = jnp.pad(u, ((0, 0), (0, 0), (0, 1)))[:, :, 1:]
        y = (jnp.einsum("oc,bcl->bol", w[0], um1, precision=hp)
             + jnp.einsum("oc,bcl->bol", w[1], u, precision=hp)
             + jnp.einsum("oc,bcl->bol", w[2], up1, precision=hp))
        return jnp.maximum(y * s[None, :, None] + t[None, :, None], 0.0)

    def c2(v, bp):
        h = layer(v, bp["wa"], bp["sa"], bp["ta"])
        return layer(h, bp["wb"], bp["sb"], bp["tb"])

    ox = c2(hx, params["c2"]["x"])
    oy = c2(hy, params["c2"]["y"])
    ocu = c2(hcu, params["c2"]["cup"])
    ocd = c2(hcd, params["c2"]["cdown"])
    return jnp.stack([ox, oy], axis=-1), jnp.stack([ocu, ocd], axis=-1)


# --------------------------------------------------------------------------
if __name__ == "__main__":
    # Square feature map so the hough_x/hough_y reshapes (-1, pers_h) hold.
    B, C, H, W = 2, 8, 16, 16
    pers_h = W
    D = C // 2                                        # CONV1_CHANNEL_FACTOR=2

    key = jax.random.PRNGKey(0)
    k_in, k_par = jax.random.split(key)
    pers = jax.random.normal(k_in, (B, C, H, W), jnp.float32)
    params = init_params(k_par, C, D)

    vup_np, vdn_np = make_vote_masks(H, W)            # (H*W, K) each
    vup = jnp.asarray(vup_np)
    vdn = jnp.asarray(vdn_np)
    K = int(vup.shape[1])

    # One-time operand packing (kept out of the per-call forward).
    ops = pack_operands(params, vup, vdn, H, W)
    jax.block_until_ready(ops)

    hough_feat, hough_feat_cud = pallas_forward_jit(
        pers, ops, pers_h=pers_h, K=K)
    jax.block_until_ready((hough_feat, hough_feat_cud))

    ref_feat, ref_cud = reference_forward(pers, params, vup, vdn)
    assert hough_feat.shape == (B, D, pers_h, 2)
    assert hough_feat_cud.shape == (B, D, K, 2)
    if not (jnp.allclose(hough_feat, ref_feat, rtol=5e-2, atol=5e-2) and
            jnp.allclose(hough_feat_cud, ref_cud, rtol=5e-2, atol=5e-2)):
        raise RuntimeError("Pallas kernel output does not match reference")

    print("KERNEL_OK")
</pallas_src>

<mosaic_0001>
module attributes {stable_mosaic.version = 11 : i64} {
  func.func @fused_kernel(%arg0: i32, %arg1: memref<1x8x256xbf16, #tpu.memory_space<vmem>>, %arg2: memref<16x8xbf16, #tpu.memory_space<vmem>>, %arg3: memref<16x1xf32, #tpu.memory_space<vmem>>, %arg4: memref<16x1xf32, #tpu.memory_space<vmem>>, %arg5: memref<256x128xbf16, #tpu.memory_space<vmem>>, %arg6: memref<256x128xbf16, #tpu.memory_space<vmem>>, %arg7: memref<256x128xbf16, #tpu.memory_space<vmem>>, %arg8: memref<256x128xbf16, #tpu.memory_space<vmem>>, %arg9: memref<16x48xbf16, #tpu.memory_space<vmem>>, %arg10: memref<16x1xf32, #tpu.memory_space<vmem>>, %arg11: memref<16x1xf32, #tpu.memory_space<vmem>>, %arg12: memref<16x48xbf16, #tpu.memory_space<vmem>>, %arg13: memref<16x1xf32, #tpu.memory_space<vmem>>, %arg14: memref<16x1xf32, #tpu.memory_space<vmem>>, %arg15: memref<16x128xf32, #tpu.memory_space<vmem>>, %arg16: memref<1x16x128xf32, #tpu.memory_space<vmem>>) attributes {dimension_semantics = [#tpu.dimension_semantics<parallel>], iteration_bounds = array<i64: 2>, scalar_prefetch = 0 : i64, scratch_operands = 0 : i64, tpu.core_type = #tpu.core_type<tc>, window_params = [{transform_indices = @transform_0, window_bounds = array<i64: 1, 8, 256>}, {pipeline_mode = #tpu.pipeline_mode<synchronous>, transform_indices = @transform_1, window_bounds = array<i64: 16, 8>}, {pipeline_mode = #tpu.pipeline_mode<synchronous>, transform_indices = @transform_2, window_bounds = array<i64: 16, 1>}, {pipeline_mode = #tpu.pipeline_mode<synchronous>, transform_indices = @transform_3, window_bounds = array<i64: 16, 1>}, {pipeline_mode = #tpu.pipeline_mode<synchronous>, transform_indices = @transform_4, window_bounds = array<i64: 256, 128>}, {pipeline_mode = #tpu.pipeline_mode<synchronous>, transform_indices = @transform_5, window_bounds = array<i64: 256, 128>}, {pipeline_mode = #tpu.pipeline_mode<synchronous>, transform_indices = @transform_6, window_bounds = array<i64: 256, 128>}, {pipeline_mode = #tpu.pipeline_mode<synchronous>, transform_indices = @transform_7, window_bounds = array<i64: 256, 128>}, {pipeline_mode = #tpu.pipeline_mode<synchronous>, transform_indices = @transform_8, window_bounds = array<i64: 16, 48>}, {pipeline_mode = #tpu.pipeline_mode<synchronous>, transform_indices = @transform_9, window_bounds = array<i64: 16, 1>}, {pipeline_mode = #tpu.pipeline_mode<synchronous>, transform_indices = @transform_10, window_bounds = array<i64: 16, 1>}, {pipeline_mode = #tpu.pipeline_mode<synchronous>, transform_indices = @transform_11, window_bounds = array<i64: 16, 48>}, {pipeline_mode = #tpu.pipeline_mode<synchronous>, transform_indices = @transform_12, window_bounds = array<i64: 16, 1>}, {pipeline_mode = #tpu.pipeline_mode<synchronous>, transform_indices = @transform_13, window_bounds = array<i64: 16, 1>}, {pipeline_mode = #tpu.pipeline_mode<synchronous>, transform_indices = @transform_14, window_bounds = array<i64: 16, 128>}, {transform_indices = @transform_15, window_bounds = array<i64: 1, 16, 128>}]} {
    %c0 = arith.constant 0 : index
    %c0_0 = arith.constant 0 : index
    %0 = vector.load %arg2[%c0, %c0_0] : memref<16x8xbf16, #tpu.memory_space<vmem>>, vector<16x8xbf16>
    %c0_1 = arith.constant 0 : index
    %c0_2 = arith.constant 0 : index
    %c0_3 = arith.constant 0 : index
    %1 = vector.load %arg1[%c0_1, %c0_2, %c0_3] : memref<1x8x256xbf16, #tpu.memory_space<vmem>>, vector<1x8x256xbf16>
    %2 = vector.shape_cast %1 : vector<1x8x256xbf16> to vector<8x256xbf16>
    %cst = arith.constant dense<0.000000e+00> : vector<16x256xf32>
    %3 = tpu.matmul %0, %2, %cst {dimension_numbers = #tpu.dot_dimension_numbers<[1], [0], [0], [1], [0, 0, 1, 1], [], []>} : vector<16x8xbf16>, vector<8x256xbf16>, vector<16x256xf32> -> vector<16x256xf32>
    %c0_4 = arith.constant 0 : index
    %c0_5 = arith.constant 0 : index
    %4 = vector.load %arg3[%c0_4, %c0_5] : memref<16x1xf32, #tpu.memory_space<vmem>>, vector<16x1xf32>
    %5 = vector.broadcast %4 : vector<16x1xf32> to vector<16x256xf32>
    %6 = arith.mulf %3, %5 : vector<16x256xf32>
    %c0_6 = arith.constant 0 : index
    %c0_7 = arith.constant 0 : index
    %7 = vector.load %arg4[%c0_6, %c0_7] : memref<16x1xf32, #tpu.memory_space<vmem>>, vector<16x1xf32>
    %8 = vector.broadcast %7 : vector<16x1xf32> to vector<16x256xf32>
    %9 = arith.addf %6, %8 : vector<16x256xf32>
    %cst_8 = arith.constant 0.000000e+00 : f32
    %10 = vector.broadcast %cst_8 : f32 to vector<16x256xf32>
    %11 = arith.maximumf %9, %10 : vector<16x256xf32>
    %12 = arith.truncf %11 : vector<16x256xf32> to vector<16x256xbf16>
    %13 = vector.extract_strided_slice %12 {offsets = [0, 0], sizes = [4, 256], strides = [1, 1]} : vector<16x256xbf16> to vector<4x256xbf16>
    %c0_9 = arith.constant 0 : index
    %c0_10 = arith.constant 0 : index
    %14 = vector.load %arg5[%c0_9, %c0_10] : memref<256x128xbf16, #tpu.memory_space<vmem>>, vector<256x128xbf16>
    %cst_11 = arith.constant dense<0.000000e+00> : vector<4x128xf32>
    %15 = tpu.matmul %13, %14, %cst_11 {dimension_numbers = #tpu.dot_dimension_numbers<[1], [0], [0], [1], [0, 0, 1, 1], [], []>} : vector<4x256xbf16>, vector<256x128xbf16>, vector<4x128xf32> -> vector<4x128xf32>
    %16 = vector.extract_strided_slice %12 {offsets = [4, 0], sizes = [4, 256], strides = [1, 1]} : vector<16x256xbf16> to vector<4x256xbf16>
    %c0_12 = arith.constant 0 : index
    %c0_13 = arith.constant 0 : index
    %17 = vector.load %arg6[%c0_12, %c0_13] : memref<256x128xbf16, #tpu.memory_space<vmem>>, vector<256x128xbf16>
    %cst_14 = arith.constant dense<0.000000e+00> : vector<4x128xf32>
    %18 = tpu.matmul %16, %17, %cst_14 {dimension_numbers = #tpu.dot_dimension_numbers<[1], [0], [0], [1], [0, 0, 1, 1], [], []>} : vector<4x256xbf16>, vector<256x128xbf16>, vector<4x128xf32> -> vector<4x128xf32>
    %19 = vector.extract_strided_slice %12 {offsets = [8, 0], sizes = [4, 256], strides = [1, 1]} : vector<16x256xbf16> to vector<4x256xbf16>
    %c0_15 = arith.constant 0 : index
    %c0_16 = arith.constant 0 : index
    %20 = vector.load %arg7[%c0_15, %c0_16] : memref<256x128xbf16, #tpu.memory_space<vmem>>, vector<256x128xbf16>
    %cst_17 = arith.constant dense<0.000000e+00> : vector<4x128xf32>
    %21 = tpu.matmul %19, %20, %cst_17 {dimension_numbers = #tpu.dot_dimension_numbers<[1], [0], [0], [1], [0, 0, 1, 1], [], []>} : vector<4x256xbf16>, vector<256x128xbf16>, vector<4x128xf32> -> vector<4x128xf32>
    %22 = vector.extract_strided_slice %12 {offsets = [12, 0], sizes = [4, 256], strides = [1, 1]} : vector<16x256xbf16> to vector<4x256xbf16>
    %c0_18 = arith.constant 0 : index
    %c0_19 = arith.constant 0 : index
    %23 = vector.load %arg8[%c0_18, %c0_19] : memref<256x128xbf16, #tpu.memory_space<vmem>>, vector<256x128xbf16>
    %cst_20 = arith.constant dense<0.000000e+00> : vector<4x128xf32>
    %24 = tpu.matmul %22, %23, %cst_20 {dimension_numbers = #tpu.dot_dimension_numbers<[1], [0], [0], [1], [0, 0, 1, 1], [], []>} : vector<4x256xbf16>, vector<256x128xbf16>, vector<4x128xf32> -> vector<4x128xf32>
    %25 = tpu.concatenate %15, %18, %21, %24 in 0 : vector<4x128xf32>, vector<4x128xf32>, vector<4x128xf32>, vector<4x128xf32> -> vector<16x128xf32>
    %26 = tpu.iota {dimensions = array<i32: 1>} : vector<16x128xi32>
    %c0_i32 = arith.constant 0 : i32
    %27 = vector.broadcast %c0_i32 : i32 to vector<16x128xi32>
    %28 = arith.cmpi eq, %26, %27 : vector<16x128xi32>
    %c1_i32 = arith.constant 1 : i32
    %29 = tpu.dynamic_rotate %25 by %c1_i32 dim 1 : vector<16x128xf32>, i32 -> vector<16x128xf32>
    %cst_21 = arith.constant 0.000000e+00 : f32
    %30 = vector.broadcast %cst_21 : f32 to vector<16x128xf32>
    %31 = arith.select %28, %30, %29 : vector<16x128xi1>, vector<16x128xf32>
    %c127_i32 = arith.constant 127 : i32
    %32 = vector.broadcast %c127_i32 : i32 to vector<16x128xi32>
    %33 = arith.cmpi eq, %26, %32 : vector<16x128xi32>
    %c127_i32_22 = arith.constant 127 : i32
    %34 = tpu.dynamic_rotate %25 by %c127_i32_22 dim 1 : vector<16x128xf32>, i32 -> vector<16x128xf32>
    %cst_23 = arith.constant 0.000000e+00 : f32
    %35 = vector.broadcast %cst_23 : f32 to vector<16x128xf32>
    %36 = arith.select %33, %35, %34 : vector<16x128xi1>, vector<16x128xf32>
    %37 = tpu.concatenate %31, %25, %36 in 0 : vector<16x128xf32>, vector<16x128xf32>, vector<16x128xf32> -> vector<48x128xf32>
    %38 = arith.truncf %37 : vector<48x128xf32> to vector<48x128xbf16>
    %c0_24 = arith.constant 0 : index
    %c0_25 = arith.constant 0 : index
    %39 = vector.load %arg9[%c0_24, %c0_25] : memref<16x48xbf16, #tpu.memory_space<vmem>>, vector<16x48xbf16>
    %cst_26 = arith.constant dense<0.000000e+00> : vector<16x128xf32>
    %40 = tpu.matmul %39, %38, %cst_26 {dimension_numbers = #tpu.dot_dimension_numbers<[1], [0], [0], [1], [0, 0, 1, 1], [], []>} : vector<16x48xbf16>, vector<48x128xbf16>, vector<16x128xf32> -> vector<16x128xf32>
    %c0_27 = arith.constant 0 : index
    %c0_28 = arith.constant 0 : index
    %41 = vector.load %arg10[%c0_27, %c0_28] : memref<16x1xf32, #tpu.memory_space<vmem>>, vector<16x1xf32>
    %42 = vector.broadcast %41 : vector<16x1xf32> to vector<16x128xf32>
    %43 = arith.mulf %40, %42 : vector<16x128xf32>
    %c0_29 = arith.constant 0 : index
    %c0_30 = arith.constant 0 : index
    %44 = vector.load %arg11[%c0_29, %c0_30] : memref<16x1xf32, #tpu.memory_space<vmem>>, vector<16x1xf32>
    %45 = vector.broadcast %44 : vector<16x1xf32> to vector<16x128xf32>
    %46 = arith.addf %43, %45 : vector<16x128xf32>
    %cst_31 = arith.constant 0.000000e+00 : f32
    %47 = vector.broadcast %cst_31 : f32 to vector<16x128xf32>
    %48 = arith.maximumf %46, %47 : vector<16x128xf32>
    %c0_32 = arith.constant 0 : index
    %c0_33 = arith.constant 0 : index
    %49 = vector.load %arg15[%c0_32, %c0_33] : memref<16x128xf32, #tpu.memory_space<vmem>>, vector<16x128xf32>
    %50 = arith.mulf %48, %49 : vector<16x128xf32>
    %c0_i32_34 = arith.constant 0 : i32
    %51 = vector.broadcast %c0_i32_34 : i32 to vector<16x128xi32>
    %52 = arith.cmpi eq, %26, %51 : vector<16x128xi32>
    %c1_i32_35 = arith.constant 1 : i32
    %53 = tpu.dynamic_rotate %50 by %c1_i32_35 dim 1 : vector<16x128xf32>, i32 -> vector<16x128xf32>
    %cst_36 = arith.constant 0.000000e+00 : f32
    %54 = vector.broadcast %cst_36 : f32 to vector<16x128xf32>
    %55 = arith.select %52, %54, %53 : vector<16x128xi1>, vector<16x128xf32>
    %c127_i32_37 = arith.constant 127 : i32
    %56 = vector.broadcast %c127_i32_37 : i32 to vector<16x128xi32>
    %57 = arith.cmpi eq, %26, %56 : vector<16x128xi32>
    %c127_i32_38 = arith.constant 127 : i32
    %58 = tpu.dynamic_rotate %50 by %c127_i32_38 dim 1 : vector<16x128xf32>, i32 -> vector<16x128xf32>
    %cst_39 = arith.constant 0.000000e+00 : f32
    %59 = vector.broadcast %cst_39 : f32 to vector<16x128xf32>
    %60 = arith.select %57, %59, %58 : vector<16x128xi1>, vector<16x128xf32>
    %61 = tpu.concatenate %55, %50, %60 in 0 : vector<16x128xf32>, vector<16x128xf32>, vector<16x128xf32> -> vector<48x128xf32>
    %62 = arith.truncf %61 : vector<48x128xf32> to vector<48x128xbf16>
    %c0_40 = arith.constant 0 : index
    %c0_41 = arith.constant 0 : index
    %63 = vector.load %arg12[%c0_40, %c0_41] : memref<16x48xbf16, #tpu.memory_space<vmem>>, vector<16x48xbf16>
    %cst_42 = arith.constant dense<0.000000e+00> : vector<16x128xf32>
    %64 = tpu.matmul %63, %62, %cst_42 {dimension_numbers = #tpu.dot_dimension_numbers<[1], [0], [0], [1], [0, 0, 1, 1], [], []>} : vector<16x48xbf16>, vector<48x128xbf16>, vector<16x128xf32> -> vector<16x128xf32>
    %c0_43 = arith.constant 0 : index
    %c0_44 = arith.constant 0 : index
    %65 = vector.load %arg13[%c0_43, %c0_44] : memref<16x1xf32, #tpu.memory_space<vmem>>, vector<16x1xf32>
    %66 = vector.broadcast %65 : vector<16x1xf32> to vector<16x128xf32>
    %67 = arith.mulf %64, %66 : vector<16x128xf32>
    %c0_45 = arith.constant 0 : index
    %c0_46 = arith.constant 0 : index
    %68 = vector.load %arg14[%c0_45, %c0_46] : memref<16x1xf32, #tpu.memory_space<vmem>>, vector<16x1xf32>
    %69 = vector.broadcast %68 : vector<16x1xf32> to vector<16x128xf32>
    %70 = arith.addf %67, %69 : vector<16x128xf32>
    %cst_47 = arith.constant 0.000000e+00 : f32
    %71 = vector.broadcast %cst_47 : f32 to vector<16x128xf32>
    %72 = arith.maximumf %70, %71 : vector<16x128xf32>
    %c0_48 = arith.constant 0 : index
    %c0_49 = arith.constant 0 : index
    %c0_50 = arith.constant 0 : index
    %73 = vector.load %arg16[%c0_48, %c0_49, %c0_50] : memref<1x16x128xf32, #tpu.memory_space<vmem>>, vector<1x16x128xf32>
    %74 = vector.shape_cast %73 : vector<1x16x128xf32> to vector<16x128xf32>
    %75 = vector.shape_cast %72 : vector<16x128xf32> to vector<1x16x128xf32>
    tpu.vector_store %arg16[%c0_48, %c0_49, %c0_50], %75 {strides = array<i32>} : memref<1x16x128xf32, #tpu.memory_space<vmem>>, vector<1x16x128xf32>,
    return
  }
  func.func @transform_0(%arg0: i32) -> (i32, i32, i32) {
    %c0_i32 = arith.constant 0 : i32
    %c0_i32_0 = arith.constant 0 : i32
    %c0_i32_1 = arith.constant 0 : i32
    return %arg0, %c0_i32, %c0_i32_0 : i32, i32, i32
  }
  func.func @transform_1(%arg0: i32) -> (i32, i32) {
    %c0_i32 = arith.constant 0 : i32
    %c0_i32_0 = arith.constant 0 : i32
    %c0_i32_1 = arith.constant 0 : i32
    return %c0_i32, %c0_i32_0 : i32, i32
  }
  func.func @transform_2(%arg0: i32) -> (i32, i32) {
    %c0_i32 = arith.constant 0 : i32
    %c0_i32_0 = arith.constant 0 : i32
    %c0_i32_1 = arith.constant 0 : i32
    return %c0_i32, %c0_i32_0 : i32, i32
  }
  func.func @transform_3(%arg0: i32) -> (i32, i32) {
    %c0_i32 = arith.constant 0 : i32
    %c0_i32_0 = arith.constant 0 : i32
    %c0_i32_1 = arith.constant 0 : i32
    return %c0_i32, %c0_i32_0 : i32, i32
  }
  func.func @transform_4(%arg0: i32) -> (i32, i32) {
    %c0_i32 = arith.constant 0 : i32
    %c0_i32_0 = arith.constant 0 : i32
    %c0_i32_1 = arith.constant 0 : i32
    return %c0_i32, %c0_i32_0 : i32, i32
  }
  func.func @transform_5(%arg0: i32) -> (i32, i32) {
    %c0_i32 = arith.constant 0 : i32
    %c0_i32_0 = arith.constant 0 : i32
    %c0_i32_1 = arith.constant 0 : i32
    return %c0_i32, %c0_i32_0 : i32, i32
  }
  func.func @transform_6(%arg0: i32) -> (i32, i32) {
    %c0_i32 = arith.constant 0 : i32
    %c0_i32_0 = arith.constant 0 : i32
    %c0_i32_1 = arith.constant 0 : i32
    return %c0_i32, %c0_i32_0 : i32, i32
  }
  func.func @transform_7(%arg0: i32) -> (i32, i32) {
    %c0_i32 = arith.constant 0 : i32
    %c0_i32_0 = arith.constant 0 : i32
    %c0_i32_1 = arith.constant 0 : i32
    return %c0_i32, %c0_i32_0 : i32, i32
  }
  func.func @transform_8(%arg0: i32) -> (i32, i32) {
    %c0_i32 = arith.constant 0 : i32
    %c0_i32_0 = arith.constant 0 : i32
    %c0_i32_1 = arith.constant 0 : i32
    return %c0_i32, %c0_i32_0 : i32, i32
  }
  func.func @transform_9(%arg0: i32) -> (i32, i32) {
    %c0_i32 = arith.constant 0 : i32
    %c0_i32_0 = arith.constant 0 : i32
    %c0_i32_1 = arith.constant 0 : i32
    return %c0_i32, %c0_i32_0 : i32, i32
  }
  func.func @transform_10(%arg0: i32) -> (i32, i32) {
    %c0_i32 = arith.constant 0 : i32
    %c0_i32_0 = arith.constant 0 : i32
    %c0_i32_1 = arith.constant 0 : i32
    return %c0_i32, %c0_i32_0 : i32, i32
  }
  func.func @transform_11(%arg0: i32) -> (i32, i32) {
    %c0_i32 = arith.constant 0 : i32
    %c0_i32_0 = arith.constant 0 : i32
    %c0_i32_1 = arith.constant 0 : i32
    return %c0_i32, %c0_i32_0 : i32, i32
  }
  func.func @transform_12(%arg0: i32) -> (i32, i32) {
    %c0_i32 = arith.constant 0 : i32
    %c0_i32_0 = arith.constant 0 : i32
    %c0_i32_1 = arith.constant 0 : i32
    return %c0_i32, %c0_i32_0 : i32, i32
  }
  func.func @transform_13(%arg0: i32) -> (i32, i32) {
    %c0_i32 = arith.constant 0 : i32
    %c0_i32_0 = arith.constant 0 : i32
    %c0_i32_1 = arith.constant 0 : i32
    return %c0_i32, %c0_i32_0 : i32, i32
  }
  func.func @transform_14(%arg0: i32) -> (i32, i32) {
    %c0_i32 = arith.constant 0 : i32
    %c0_i32_0 = arith.constant 0 : i32
    %c0_i32_1 = arith.constant 0 : i32
    return %c0_i32, %c0_i32_0 : i32, i32
  }
  func.func @transform_15(%arg0: i32) -> (i32, i32, i32) {
    %c0_i32 = arith.constant 0 : i32
    %c0_i32_0 = arith.constant 0 : i32
    %c0_i32_1 = arith.constant 0 : i32
    return %arg0, %c0_i32, %c0_i32_0 : i32, i32, i32
  }
}

</mosaic_0001>

<llo_original>
// kernel: pallas_forward.1
$region0: #{pallas_forward.1}
  #allocation0 [shape = 'u32[]', space=smem, size = 0x4, offset = 0x4, fixed_abs, tag = 'smem constant byte address 0x4 - core index']
  #allocation1 [shape = 'u32[144,128]{1,0:T(1,128)}', space=vmem, size = 0x12000, scoped, tag = 'internal scratch']
  %s0 = inlined_call_operand.vmem [shape: bf16[2,8,256], index: 0, kind: input, shape index: {}]
  %s1 = inlined_call_operand.vmem [shape: bf16[16,8], index: 1, kind: input, shape index: {}]
  %s2 = inlined_call_operand.vmem [shape: f32[16,1], index: 2, kind: input, shape index: {}]
  %s3 = inlined_call_operand.vmem [shape: f32[16,1], index: 3, kind: input, shape index: {}]
  %s4 = inlined_call_operand.vmem [shape: bf16[256,128], index: 4, kind: input, shape index: {}]
  %s5 = inlined_call_operand.vmem [shape: bf16[256,128], index: 5, kind: input, shape index: {}]
  %s6 = inlined_call_operand.vmem [shape: bf16[256,128], index: 6, kind: input, shape index: {}]
  %s7 = inlined_call_operand.vmem [shape: bf16[256,128], index: 7, kind: input, shape index: {}]
  %s8 = inlined_call_operand.vmem [shape: bf16[16,48], index: 8, kind: input, shape index: {}]
  %s9 = inlined_call_operand.vmem [shape: f32[16,1], index: 9, kind: input, shape index: {}]
  %s10 = inlined_call_operand.vmem [shape: f32[16,1], index: 10, kind: input, shape index: {}]
  %s11 = inlined_call_operand.vmem [shape: bf16[16,48], index: 11, kind: input, shape index: {}]
  %s12 = inlined_call_operand.vmem [shape: f32[16,1], index: 12, kind: input, shape index: {}]
  %s13 = inlined_call_operand.vmem [shape: f32[16,1], index: 13, kind: input, shape index: {}]
  %s14 = inlined_call_operand.vmem [shape: f32[16,128], index: 14, kind: input, shape index: {}]
  %s15 = inlined_call_operand.vmem [shape: f32[2,16,128], index: 15, kind: output, shape index: {}]
  %s16 = sld [smem:[#allocation0]]
  $region93: #{pallas_forward.1} parent=0
    _
  %s18 = ssub.s32 1, %s16
  %s19 = scalar_select 0, %s18, %s16
  loop: start=0, step=1, limit=4
  $region2: #{pallas_forward.1} parent=0 // loop_pre_header
    _
  $region3: #{pallas_forward.1} parent=0 // loop_header
    %s21 = sphi 0, %s25
    %p22 = scmp.ge.s32.totalorder %s21, 4
    %s31 = sphi 0, %s33
    %s34 = sphi 0, %s31
    %s35 = sphi 0, %s34
    %s51 = sphi 0, %s35
    %s55 = sphi 0, %s55
    %s57 = sphi 0, %s55
    %s58 = sphi 0, %s57
    %s72 = sphi 0, %s58
    %s76 = sphi 0, %s76
    %s78 = sphi 0, %s76
    %s79 = sphi 0, %s78
    %s93 = sphi 0, %s79
    %s97 = sphi 0, %s97
    %s99 = sphi 0, %s97
    %s100 = sphi 0, %s99
    %s114 = sphi 0, %s100
    %s118 = sphi 0, %s118
    %s120 = sphi 0, %s118
    %s121 = sphi 0, %s120
    %s135 = sphi 0, %s121
    %s139 = sphi 0, %s139
    %s141 = sphi 0, %s139
    %s142 = sphi 0, %s141
    %s156 = sphi 0, %s142
    %s160 = sphi 0, %s160
    %s162 = sphi 0, %s160
    %s163 = sphi 0, %s162
    %s177 = sphi 0, %s163
    %s181 = sphi 0, %s181
    %s183 = sphi 0, %s181
    %s184 = sphi 0, %s183
    %s198 = sphi 0, %s184
    %s202 = sphi 0, %s202
    %s204 = sphi 0, %s202
    %s205 = sphi 0, %s204
    %s219 = sphi 0, %s205
    %s223 = sphi 0, %s223
    %s225 = sphi 0, %s223
    %s226 = sphi 0, %s225
    %s240 = sphi 0, %s226
    %s244 = sphi 0, %s244
    %s246 = sphi 0, %s244
    %s247 = sphi 0, %s246
    %s261 = sphi 0, %s247
    %s265 = sphi 0, %s265
    %s267 = sphi 0, %s265
    %s268 = sphi 0, %s267
    %s282 = sphi 0, %s268
    %s286 = sphi 0, %s286
    %s288 = sphi 0, %s286
    %s289 = sphi 0, %s288
    %s303 = sphi 0, %s289
    %s307 = sphi 0, %s307
    %s309 = sphi 0, %s307
    %s310 = sphi 0, %s309
    %s324 = sphi 0, %s310
    %s328 = sphi 0, %s328
    %s330 = sphi 0, %s328
    %s331 = sphi 0, %s330
    %s345 = sphi 0, %s331
    %s351 = sphi 0, %s353
    %s354 = sphi 0, %s351
    %s355 = sphi 0, %s354
    %s371 = sphi 0, %s355
  $region4: #{pallas_forward.1} parent=0 // loop_header_branch
    %24 = sbr.rel (%p22) target = $region8
  $region5: #{pallas_forward.1} parent=0 // loop_body
    %s26 = ssub.s32 %s21, 1
    %s27 = ssub.s32 %s21, 2
    %s28 = sadd.s32 %s21, 1
    %s29 = ssub.s32 %s21, %s28
    %p30 = scmp.eq.s32.totalorder %s29, 0
    %s32 = sadd.s32 %s31, 1
    %s33 = scalar_select %p30, %s31, %s32
    %p36 = pneg %p30
    %p37 = scmp.eq.s32.totalorder %s21, 1
    %p38 = por %p36, %p37
    %p39 = scmp.ne.s32.totalorder %s31, %s34
    %p40 = scmp.eq.s32.totalorder %s21, 0
    %p41 = por %p39, %p40
    %p42 = scmp.ne.s32.totalorder %s31, %s34
    %p43 = scmp.eq.s32.totalorder %s26, 1
    %p44 = por %p42, %p43
    %p45 = scmp.ne.s32.totalorder %s34, %s35
    %p46 = scmp.eq.s32.totalorder %s26, 0
    %p47 = por %p45, %p46
    %p48 = scmp.ne.s32.totalorder %s34, %s35
    %p49 = scmp.eq.s32.totalorder %s27, 1
    %p50 = por %p48, %p49
    %p52 = scmp.ne.s32.totalorder %s35, %s51
    %p53 = scmp.eq.s32.totalorder %s27, 0
    %p54 = por %p52, %p53
    %s56 = sadd.s32 %s55, 1
    %p59 = scmp.eq.s32.totalorder %s21, 1
    %p60 = scmp.ne.s32.totalorder %s55, %s57
    %p61 = scmp.eq.s32.totalorder %s21, 0
    %p62 = por %p60, %p61
    %p63 = scmp.ne.s32.totalorder %s55, %s57
    %p64 = scmp.eq.s32.totalorder %s26, 1
    %p65 = por %p63, %p64
    %p66 = scmp.ne.s32.totalorder %s57, %s58
    %p67 = scmp.eq.s32.totalorder %s26, 0
    %p68 = por %p66, %p67
    %p69 = scmp.ne.s32.totalorder %s57, %s58
    %p70 = scmp.eq.s32.totalorder %s27, 1
    %p71 = por %p69, %p70
    %p73 = scmp.ne.s32.totalorder %s58, %s72
    %p74 = scmp.eq.s32.totalorder %s27, 0
    %p75 = por %p73, %p74
    %s77 = sadd.s32 %s76, 1
    %p80 = scmp.eq.s32.totalorder %s21, 1
    %p81 = scmp.ne.s32.totalorder %s76, %s78
    %p82 = scmp.eq.s32.totalorder %s21, 0
    %p83 = por %p81, %p82
    %p84 = scmp.ne.s32.totalorder %s76, %s78
    %p85 = scmp.eq.s32.totalorder %s26, 1
    %p86 = por %p84, %p85
    %p87 = scmp.ne.s32.totalorder %s78, %s79
    %p88 = scmp.eq.s32.totalorder %s26, 0
    %p89 = por %p87, %p88
    %p90 = scmp.ne.s32.totalorder %s78, %s79
    %p91 = scmp.eq.s32.totalorder %s27, 1
    %p92 = por %p90, %p91
    %p94 = scmp.ne.s32.totalorder %s79, %s93
    %p95 = scmp.eq.s32.totalorder %s27, 0
    %p96 = por %p94, %p95
    %s98 = sadd.s32 %s97, 1
    %p101 = scmp.eq.s32.totalorder %s21, 1
    %p102 = scmp.ne.s32.totalorder %s97, %s99
    %p103 = scmp.eq.s32.totalorder %s21, 0
    %p104 = por %p102, %p103
    %p105 = scmp.ne.s32.totalorder %s97, %s99
    %p106 = scmp.eq.s32.totalorder %s26, 1
    %p107 = por %p105, %p106
    %p108 = scmp.ne.s32.totalorder %s99, %s100
    %p109 = scmp.eq.s32.totalorder %s26, 0
    %p110 = por %p108, %p109
    %p111 = scmp.ne.s32.totalorder %s99, %s100
    %p112 = scmp.eq.s32.totalorder %s27, 1
    %p113 = por %p111, %p112
    %p115 = scmp.ne.s32.totalorder %s100, %s114
    %p116 = scmp.eq.s32.totalorder %s27, 0
    %p117 = por %p115, %p116
    %s119 = sadd.s32 %s118, 1
    %p122 = scmp.eq.s32.totalorder %s21, 1
    %p123 = scmp.ne.s32.totalorder %s118, %s120
    %p124 = scmp.eq.s32.totalorder %s21, 0
    %p125 = por %p123, %p124
    %p126 = scmp.ne.s32.totalorder %s118, %s120
    %p127 = scmp.eq.s32.totalorder %s26, 1
    %p128 = por %p126, %p127
    %p129 = scmp.ne.s32.totalorder %s120, %s121
    %p130 = scmp.eq.s32.totalorder %s26, 0
    %p131 = por %p129, %p130
    %p132 = scmp.ne.s32.totalorder %s120, %s121
    %p133 = scmp.eq.s32.totalorder %s27, 1
    %p134 = por %p132, %p133
    %p136 = scmp.ne.s32.totalorder %s121, %s135
    %p137 = scmp.eq.s32.totalorder %s27, 0
    %p138 = por %p136, %p137
    %s140 = sadd.s32 %s139, 1
    %p143 = scmp.eq.s32.totalorder %s21, 1
    %p144 = scmp.ne.s32.totalorder %s139, %s141
    %p145 = scmp.eq.s32.totalorder %s21, 0
    %p146 = por %p144, %p145
    %p147 = scmp.ne.s32.totalorder %s139, %s141
    %p148 = scmp.eq.s32.totalorder %s26, 1
    %p149 = por %p147, %p148
    %p150 = scmp.ne.s32.totalorder %s141, %s142
    %p151 = scmp.eq.s32.totalorder %s26, 0
    %p152 = por %p150, %p151
    %p153 = scmp.ne.s32.totalorder %s141, %s142
    %p154 = scmp.eq.s32.totalorder %s27, 1
    %p155 = por %p153, %p154
    %p157 = scmp.ne.s32.totalorder %s142, %s156
    %p158 = scmp.eq.s32.totalorder %s27, 0
    %p159 = por %p157, %p158
    %s161 = sadd.s32 %s160, 1
    %p164 = scmp.eq.s32.totalorder %s21, 1
    %p165 = scmp.ne.s32.totalorder %s160, %s162
    %p166 = scmp.eq.s32.totalorder %s21, 0
    %p167 = por %p165, %p166
    %p168 = scmp.ne.s32.totalorder %s160, %s162
    %p169 = scmp.eq.s32.totalorder %s26, 1
    %p170 = por %p168, %p169
    %p171 = scmp.ne.s32.totalorder %s162, %s163
    %p172 = scmp.eq.s32.totalorder %s26, 0
    %p173 = por %p171, %p172
    %p174 = scmp.ne.s32.totalorder %s162, %s163
    %p175 = scmp.eq.s32.totalorder %s27, 1
    %p176 = por %p174, %p175
    %p178 = scmp.ne.s32.totalorder %s163, %s177
    %p179 = scmp.eq.s32.totalorder %s27, 0
    %p180 = por %p178, %p179
    %s182 = sadd.s32 %s181, 1
    %p185 = scmp.eq.s32.totalorder %s21, 1
    %p186 = scmp.ne.s32.totalorder %s181, %s183
    %p187 = scmp.eq.s32.totalorder %s21, 0
    %p188 = por %p186, %p187
    %p189 = scmp.ne.s32.totalorder %s181, %s183
    %p190 = scmp.eq.s32.totalorder %s26, 1
    %p191 = por %p189, %p190
    %p192 = scmp.ne.s32.totalorder %s183, %s184
    %p193 = scmp.eq.s32.totalorder %s26, 0
    %p194 = por %p192, %p193
    %p195 = scmp.ne.s32.totalorder %s183, %s184
    %p196 = scmp.eq.s32.totalorder %s27, 1
    %p197 = por %p195, %p196
    %p199 = scmp.ne.s32.totalorder %s184, %s198
    %p200 = scmp.eq.s32.totalorder %s27, 0
    %p201 = por %p199, %p200
    %s203 = sadd.s32 %s202, 1
    %p206 = scmp.eq.s32.totalorder %s21, 1
    %p207 = scmp.ne.s32.totalorder %s202, %s204
    %p208 = scmp.eq.s32.totalorder %s21, 0
    %p209 = por %p207, %p208
    %p210 = scmp.ne.s32.totalorder %s202, %s204
    %p211 = scmp.eq.s32.totalorder %s26, 1
    %p212 = por %p210, %p211
    %p213 = scmp.ne.s32.totalorder %s204, %s205
    %p214 = scmp.eq.s32.totalorder %s26, 0
    %p215 = por %p213, %p214
    %p216 = scmp.ne.s32.totalorder %s204, %s205
    %p217 = scmp.eq.s32.totalorder %s27, 1
    %p218 = por %p216, %p217
    %p220 = scmp.ne.s32.totalorder %s205, %s219
    %p221 = scmp.eq.s32.totalorder %s27, 0
    %p222 = por %p220, %p221
    %s224 = sadd.s32 %s223, 1
    %p227 = scmp.eq.s32.totalorder %s21, 1
    %p228 = scmp.ne.s32.totalorder %s223, %s225
    %p229 = scmp.eq.s32.totalorder %s21, 0
    %p230 = por %p228, %p229
    %p231 = scmp.ne.s32.totalorder %s223, %s225
    %p232 = scmp.eq.s32.totalorder %s26, 1
    %p233 = por %p231, %p232
    %p234 = scmp.ne.s32.totalorder %s225, %s226
    %p235 = scmp.eq.s32.totalorder %s26, 0
    %p236 = por %p234, %p235
    %p237 = scmp.ne.s32.totalorder %s225, %s226
    %p238 = scmp.eq.s32.totalorder %s27, 1
    %p239 = por %p237, %p238
    %p241 = scmp.ne.s32.totalorder %s226, %s240
    %p242 = scmp.eq.s32.totalorder %s27, 0
    %p243 = por %p241, %p242
    %s245 = sadd.s32 %s244, 1
    %p248 = scmp.eq.s32.totalorder %s21, 1
    %p249 = scmp.ne.s32.totalorder %s244, %s246
    %p250 = scmp.eq.s32.totalorder %s21, 0
    %p251 = por %p249, %p250
    %p252 = scmp.ne.s32.totalorder %s244, %s246
    %p253 = scmp.eq.s32.totalorder %s26, 1
    %p254 = por %p252, %p253
    %p255 = scmp.ne.s32.totalorder %s246, %s247
    %p256 = scmp.eq.s32.totalorder %s26, 0
    %p257 = por %p255, %p256
    %p258 = scmp.ne.s32.totalorder %s246, %s247
    %p259 = scmp.eq.s32.totalorder %s27, 1
    %p260 = por %p258, %p259
    %p262 = scmp.ne.s32.totalorder %s247, %s261
    %p263 = scmp.eq.s32.totalorder %s27, 0
    %p264 = por %p262, %p263
    %s266 = sadd.s32 %s265, 1
    %p269 = scmp.eq.s32.totalorder %s21, 1
    %p270 = scmp.ne.s32.totalorder %s265, %s267
    %p271 = scmp.eq.s32.totalorder %s21, 0
    %p272 = por %p270, %p271
    %p273 = scmp.ne.s32.totalorder %s265, %s267
    %p274 = scmp.eq.s32.totalorder %s26, 1
    %p275 = por %p273, %p274
    %p276 = scmp.ne.s32.totalorder %s267, %s268
    %p277 = scmp.eq.s32.totalorder %s26, 0
    %p278 = por %p276, %p277
    %p279 = scmp.ne.s32.totalorder %s267, %s268
    %p280 = scmp.eq.s32.totalorder %s27, 1
    %p281 = por %p279, %p280
    %p283 = scmp.ne.s32.totalorder %s268, %s282
    %p284 = scmp.eq.s32.totalorder %s27, 0
    %p285 = por %p283, %p284
    %s287 = sadd.s32 %s286, 1
    %p290 = scmp.eq.s32.totalorder %s21, 1
    %p291 = scmp.ne.s32.totalorder %s286, %s288
    %p292 = scmp.eq.s32.totalorder %s21, 0
    %p293 = por %p291, %p292
    %p294 = scmp.ne.s32.totalorder %s286, %s288
    %p295 = scmp.eq.s32.totalorder %s26, 1
    %p296 = por %p294, %p295
    %p297 = scmp.ne.s32.totalorder %s288, %s289
    %p298 = scmp.eq.s32.totalorder %s26, 0
    %p299 = por %p297, %p298
    %p300 = scmp.ne.s32.totalorder %s288, %s289
    %p301 = scmp.eq.s32.totalorder %s27, 1
    %p302 = por %p300, %p301
    %p304 = scmp.ne.s32.totalorder %s289, %s303
    %p305 = scmp.eq.s32.totalorder %s27, 0
    %p306 = por %p304, %p305
    %s308 = sadd.s32 %s307, 1
    %p311 = scmp.eq.s32.totalorder %s21, 1
    %p312 = scmp.ne.s32.totalorder %s307, %s309
    %p313 = scmp.eq.s32.totalorder %s21, 0
    %p314 = por %p312, %p313
    %p315 = scmp.ne.s32.totalorder %s307, %s309
    %p316 = scmp.eq.s32.totalorder %s26, 1
    %p317 = por %p315, %p316
    %p318 = scmp.ne.s32.totalorder %s309, %s310
    %p319 = scmp.eq.s32.totalorder %s26, 0
    %p320 = por %p318, %p319
    %p321 = scmp.ne.s32.totalorder %s309, %s310
    %p322 = scmp.eq.s32.totalorder %s27, 1
    %p323 = por %p321, %p322
    %p325 = scmp.ne.s32.totalorder %s310, %s324
    %p326 = scmp.eq.s32.totalorder %s27, 0
    %p327 = por %p325, %p326
    %s329 = sadd.s32 %s328, 1
    %p332 = scmp.eq.s32.totalorder %s21, 1
    %p333 = scmp.ne.s32.totalorder %s328, %s330
    %p334 = scmp.eq.s32.totalorder %s21, 0
    %p335 = por %p333, %p334
    %p336 = scmp.ne.s32.totalorder %s328, %s330
    %p337 = scmp.eq.s32.totalorder %s26, 1
    %p338 = por %p336, %p337
    %p339 = scmp.ne.s32.totalorder %s330, %s331
    %p340 = scmp.eq.s32.totalorder %s26, 0
    %p341 = por %p339, %p340
    %p342 = scmp.ne.s32.totalorder %s330, %s331
    %p343 = scmp.eq.s32.totalorder %s27, 1
    %p344 = por %p342, %p343
    %p346 = scmp.ne.s32.totalorder %s331, %s345
    %p347 = scmp.eq.s32.totalorder %s27, 0
    %p348 = por %p346, %p347
    %s349 = ssub.s32 %s21, %s28
    %p350 = scmp.eq.s32.totalorder %s349, 0
    %s352 = sadd.s32 %s351, 1
    %s353 = scalar_select %p350, %s351, %s352
    %p356 = pneg %p350
    %p357 = scmp.eq.s32.totalorder %s21, 1
    %p358 = por %p356, %p357
    %p359 = scmp.ne.s32.totalorder %s351, %s354
    %p360 = scmp.eq.s32.totalorder %s21, 0
    %p361 = por %p359, %p360
    %p362 = scmp.ne.s32.totalorder %s351, %s354
    %p363 = scmp.eq.s32.totalorder %s26, 1
    %p364 = por %p362, %p363
    %p365 = scmp.ne.s32.totalorder %s354, %s355
    %p366 = scmp.eq.s32.totalorder %s26, 0
    %p367 = por %p365, %p366
    %p368 = scmp.ne.s32.totalorder %s354, %s355
    %p369 = scmp.eq.s32.totalorder %s27, 1
    %p370 = por %p368, %p369
    %p372 = scmp.ne.s32.totalorder %s355, %s371
    %p373 = scmp.eq.s32.totalorder %s27, 0
    %p374 = por %p372, %p373
    %p375 = scmp.le.s32.totalorder 1, %s21
    %p376 = scmp.lt.s32.totalorder %s21, 3
    %p377 = pnand %p375, %p376
    %p378 = pneg %p377
    // Predicated region
    $region9: #{pallas_forward.1} parent=5 // pred_check
      _
    $region10: #{pallas_forward.1} parent=5 // pred_check_branch
      %380 = sbr.rel (%p377) target = $region12
    $region11: #{pallas_forward.1} parent=5 // pred_region
      %s381 = ssub.s32 %s21, 1
      // Predicated region
      $region13: #{pallas_forward.1} parent=11 // pred_check
        %p382 = pneg %p68
      $region14: #{pallas_forward.1} parent=11 // pred_check_branch
        %384 = sbr.rel (%p382) target = $region16
      $region15: #{pallas_forward.1} parent=11 // pred_region
        _
      $region16: #{pallas_forward.1} parent=11 // pred_fallthru
        _
      // Predicated region
      $region17: #{pallas_forward.1} parent=11 // pred_check
        %p385 = pneg %p89
      $region18: #{pallas_forward.1} parent=11 // pred_check_branch
        %387 = sbr.rel (%p385) target = $region20
      $region19: #{pallas_forward.1} parent=11 // pred_region
        _
      $region20: #{pallas_forward.1} parent=11 // pred_fallthru
        _
      // Predicated region
      $region21: #{pallas_forward.1} parent=11 // pred_check
        %p388 = pneg %p110
      $region22: #{pallas_forward.1} parent=11 // pred_check_branch
        %390 = sbr.rel (%p388) target = $region24
      $region23: #{pallas_forward.1} parent=11 // pred_region
        _
      $region24: #{pallas_forward.1} parent=11 // pred_fallthru
        _
      // Predicated region
      $region25: #{pallas_forward.1} parent=11 // pred_check
        %p391 = pneg %p131
      $region26: #{pallas_forward.1} parent=11 // pred_check_branch
        %393 = sbr.rel (%p391) target = $region28
      $region27: #{pallas_forward.1} parent=11 // pred_region
        _
      $region28: #{pallas_forward.1} parent=11 // pred_fallthru
        _
      // Predicated region
      $region29: #{pallas_forward.1} parent=11 // pred_check
        %p394 = pneg %p152
      $region30: #{pallas_forward.1} parent=11 // pred_check_branch
        %396 = sbr.rel (%p394) target = $region32
      $region31: #{pallas_forward.1} parent=11 // pred_region
        _
      $region32: #{pallas_forward.1} parent=11 // pred_fallthru
        _
      // Predicated region
      $region33: #{pallas_forward.1} parent=11 // pred_check
        %p397 = pneg %p173
      $region34: #{pallas_forward.1} parent=11 // pred_check_branch
        %399 = sbr.rel (%p397) target = $region36
      $region35: #{pallas_forward.1} parent=11 // pred_region
        _
      $region36: #{pallas_forward.1} parent=11 // pred_fallthru
        _
      // Predicated region
      $region37: #{pallas_forward.1} parent=11 // pred_check
        %p400 = pneg %p194
      $region38: #{pallas_forward.1} parent=11 // pred_check_branch
        %402 = sbr.rel (%p400) target = $region40
      $region39: #{pallas_forward.1} parent=11 // pred_region
        _
      $region40: #{pallas_forward.1} parent=11 // pred_fallthru
        _
      // Predicated region
      $region41: #{pallas_forward.1} parent=11 // pred_check
        %p403 = pneg %p215
      $region42: #{pallas_forward.1} parent=11 // pred_check_branch
        %405 = sbr.rel (%p403) target = $region44
      $region43: #{pallas_forward.1} parent=11 // pred_region
        _
      $region44: #{pallas_forward.1} parent=11 // pred_fallthru
        _
      // Predicated region
      $region45: #{pallas_forward.1} parent=11 // pred_check
        %p406 = pneg %p236
      $region46: #{pallas_forward.1} parent=11 // pred_check_branch
        %408 = sbr.rel (%p406) target = $region48
      $region47: #{pallas_forward.1} parent=11 // pred_region
        _
      $region48: #{pallas_forward.1} parent=11 // pred_fallthru
        _
      // Predicated region
      $region49: #{pallas_forward.1} parent=11 // pred_check
        %p409 = pneg %p257
      $region50: #{pallas_forward.1} parent=11 // pred_check_branch
        %411 = sbr.rel (%p409) target = $region52
      $region51: #{pallas_forward.1} parent=11 // pred_region
        _
      $region52: #{pallas_forward.1} parent=11 // pred_fallthru
        _
      // Predicated region
      $region53: #{pallas_forward.1} parent=11 // pred_check
        %p412 = pneg %p278
      $region54: #{pallas_forward.1} parent=11 // pred_check_branch
        %414 = sbr.rel (%p412) target = $region56
      $region55: #{pallas_forward.1} parent=11 // pred_region
        _
      $region56: #{pallas_forward.1} parent=11 // pred_fallthru
        _
      // Predicated region
      $region57: #{pallas_forward.1} parent=11 // pred_check
        %p415 = pneg %p299
      $region58: #{pallas_forward.1} parent=11 // pred_check_branch
        %417 = sbr.rel (%p415) target = $region60
      $region59: #{pallas_forward.1} parent=11 // pred_region
        _
      $region60: #{pallas_forward.1} parent=11 // pred_fallthru
        _
      // Predicated region
      $region61: #{pallas_forward.1} parent=11 // pred_check
        %p418 = pneg %p320
      $region62: #{pallas_forward.1} parent=11 // pred_check_branch
        %420 = sbr.rel (%p418) target = $region64
      $region63: #{pallas_forward.1} parent=11 // pred_region
        _
      $region64: #{pallas_forward.1} parent=11 // pred_fallthru
        _
      // Predicated region
      $region65: #{pallas_forward.1} parent=11 // pred_check
        %p421 = pneg %p341
      $region66: #{pallas_forward.1} parent=11 // pred_check_branch
        %423 = sbr.rel (%p421) target = $region68
      $region67: #{pallas_forward.1} parent=11 // pred_region
        _
      $region68: #{pallas_forward.1} parent=11 // pred_fallthru
        _
    $region12: #{pallas_forward.1} parent=5 // pred_fallthru
      _
    %p424 = scmp.lt.s32.totalorder %s21, 2
    // Predicated region
    $region69: #{pallas_forward.1} parent=5 // pred_check
      %p425 = pneg %p424
    $region70: #{pallas_forward.1} parent=5 // pred_check_branch
      %427 = sbr.rel (%p425) target = $region72
    $region71: #{pallas_forward.1} parent=5 // pred_region
      // Predicated region
      $region73: #{pallas_forward.1} parent=71 // pred_check
        %p428 = pneg %p41
      $region74: #{pallas_forward.1} parent=71 // pred_check_branch
        %430 = sbr.rel (%p428) target = $region76
      $region75: #{pallas_forward.1} parent=71 // pred_region
        %p431 = scmp.lt.s32.totalorder %s21, 1
        %s432 = scalar_select %p431, %s21, 1
        %s433 = smul.addr %s432, 2
        %s434 = smul.addr %s433, 4
        %s435 = scalar_lea.vmem %s0, %s434
      $region76: #{pallas_forward.1} parent=71 // pred_fallthru
        _
    $region72: #{pallas_forward.1} parent=5 // pred_fallthru
      _
    %p436 = scmp.le.s32.totalorder 1, %s21
    %p437 = scmp.lt.s32.totalorder %s21, 3
    %p438 = pnand %p436, %p437
    %p439 = pneg %p438
    // Predicated region
    $region77: #{pallas_forward.1} parent=5 // pred_check
      _
    $region78: #{pallas_forward.1} parent=5 // pred_check_branch
      %441 = sbr.rel (%p438) target = $region80
    $region79: #{pallas_forward.1} parent=5 // pred_region
      %s442 = ssub.s32 %s21, 1
      %p443 = scmp.lt.s32.totalorder %s26, 1
      %s444 = scalar_select %p443, %s26, 1
      %s445 = smul.addr %s444, 2
      %s446 = smul.addr %s445, 4
      %s447 = scalar_lea.vmem %s0, %s446
      %p448 = pneg %p47
      %p449 = pneg %p44
      %p450 = pneg %p68
      %p451 = pneg %p65
      %p452 = pneg %p89
      %p453 = pneg %p86
      %p454 = pneg %p110
      %p455 = pneg %p107
      %p456 = pneg %p131
      %p457 = pneg %p128
      %p458 = pneg %p152
      %p459 = pneg %p149
      %p460 = pneg %p173
      %p461 = pneg %p170
      %p462 = pneg %p194
      %p463 = pneg %p191
      %p464 = pneg %p215
      %p465 = pneg %p212
      %p466 = pneg %p236
      %p467 = pneg %p233
      %p468 = pneg %p257
      %p469 = pneg %p254
      %p470 = pneg %p278
      %p471 = pneg %p275
      %p472 = pneg %p299
      %p473 = pneg %p296
      %p474 = pneg %p320
      %p475 = pneg %p317
      %p476 = pneg %p341
      %p477 = pneg %p338
      %p478 = pneg %p367
      %p479 = pneg %p364
      %p480 = scmp.lt.s32.totalorder %s26, 1
      %s481 = scalar_select %p480, %s26, 1
      %s482 = smul.addr %s481, 2
      %s483 = smul.addr %s482, 8
      %s484 = scalar_lea.vmem %s15, %s483
      %p485 = scmp.lt.s32.totalorder %s26, 1
      %s486 = scalar_select %p485, %s26, 1
      %s487 = smul.addr %s486, 2
      %s488 = smul.addr %s487, 4
      %s489 = scalar_lea.vmem %s0, %s488
      %p490 = scmp.lt.s32.totalorder %s26, 1
      %s491 = scalar_select %p490, %s26, 1
      %s492 = smul.addr %s491, 2
      %s493 = smul.addr %s492, 8
      %s494 = scalar_lea.vmem %s15, %s493
      %v496 = vld [vmem:[%s1] sm:$0xf]
      %v497 = vld [vmem:[%s1 + $0x4] sm:$0xf]
      %v498 = vld [vmem:[%s489] sm:$0xff]
      %v501 = vunpack.c.l.b16 %v496
      %v502 = vunpack.c.l.b16 %v497
      %v503 = vpack.c.b16 %v502, %v501
      %v505 = vunpack.c.l.b16 %v498
      %v506 = vunpack.c.h.b16 %v498
      %v507 = vpack.c.b16 %v505, %v505
      %v508 = vpack.c.b16 %v506, %v506
      %vm509 = vcmask 64512
      %v511 = vsel %vm509, %v503, 0
      %vm513 = vcmask 1043456
      %v515 = vsel %vm513, %v507, 0
      %v518 = vsel %vm513, %v508, 0
      %520 = vmatprep.subr.bf16.mxu0 0
      %521 = vmatpush1.bf16.msra.mxu0 0
      %522 = vmatprep.subr.bf16.mxu0 0
      %523 = vmatpush1.bf16.msra.mxu0 0
      %524 = vmatprep.subr.bf16.mxu0 0
      %525 = vmatpush1.bf16.msra.mxu0 0
      %526 = vmatprep.subr.bf16.mxu0 0
      %527 = vmatpush1.bf16.msra.mxu0 0
      %528 = vmatprep.subr.bf16.mxu0 0
      %529 = vmatpush1.bf16.msra.mxu0 0
      %530 = vmatprep.subr.bf16.mxu0 0
      %531 = vmatpush1.bf16.msra.mxu0 0
      %532 = vmatprep.subr.bf16.mxu0 0
      %533 = vmatpush1.bf16.msra.mxu0 0
      %534 = vmatprep.subr.bf16.mxu0 %v518
      %535 = vmatpush1.bf16.msra.mxu0 %v515
      %536 = vmatprep.subr.bf16.mxu0 0
      %537 = vmatpush2.bf16.msra.mxu0 0
      %538 = vmatprep.subr.bf16.mxu0 0
      %539 = vmatpush2.bf16.msra.mxu0 0
      %540 = vmatprep.subr.bf16.mxu0 0
      %541 = vmatpush2.bf16.msra.mxu0 0
      %542 = vmatprep.subr.bf16.mxu0 0
      %543 = vmatpush2.bf16.msra.mxu0 0
      %544 = vmatprep.subr.bf16.mxu0 0
      %545 = vmatpush2.bf16.msra.mxu0 0
      %546 = vmatprep.subr.bf16.mxu0 0
      %547 = vmatpush2.bf16.msra.mxu0 0
      %548 = vmatprep.subr.bf16.mxu0 0
      %549 = vmatpush2.bf16.msra.mxu0 0
      %550 = vmatprep.subr.bf16.mxu0 0
      %551 = vmatpush2.bf16.msra.mxu0 0
      %552 = vmatprep.mubr.bf16.mxu0 0
      %553 = vmatmul.mubr.bf16.gmra.mxu0 %v511
      %v554 = vpop.f32.mrf.mxu0
      %v555 = vadd.f32 0.0, %v554
      %v556 = vpop.f32.mrf.mxu0
      %v557 = vadd.f32 0.0, %v556
      %v558 = vpop.f32.mrf.mxu0
      %v559 = vadd.f32 0.0, %v558
      %v560 = vpop.f32.mrf.mxu0
      %v561 = vadd.f32 0.0, %v560
      %562 = vdwg.mxu0
      %v563 = vld [vmem:[%s2] sm:$0xff]
      %v564 = vld [vmem:[%s2 + $0x8] sm:$0xff]
      %566 = vset.pattern.permute.xlu0 0
      %567 = vperm.xlu0 %566, %v563
      %v568 = vpop.permute.xlu0 %567
      %571 = vset.pattern.permute.xlu0 0
      %572 = vperm.xlu0 %571, %v564
      %v573 = vpop.permute.xlu0 %572
      %v575 = vmul.f32 %v555, %v568
      %v576 = vmul.f32 %v557, %v568
      %v577 = vmul.f32 %v559, %v573
      %v578 = vmul.f32 %v561, %v573
      %v579 = vld [vmem:[%s3] sm:$0xff]
      %v580 = vld [vmem:[%s3 + $0x8] sm:$0xff]
      %582 = vset.pattern.permute.xlu0 0
      %583 = vperm.xlu0 %582, %v579
      %v584 = vpop.permute.xlu0 %583
      %587 = vset.pattern.permute.xlu0 0
      %588 = vperm.xlu0 %587, %v580
      %v589 = vpop.permute.xlu0 %588
      %v591 = vadd.f32 %v575, %v584
      %v592 = vadd.f32 %v576, %v584
      %v593 = vadd.f32 %v577, %v589
      %v594 = vadd.f32 %v578, %v589
      %v595 = vmax.f32 %v591, 0.0
      %v596 = vmax.f32 %v592, 0.0
      %v597 = vmax.f32 %v593, 0.0
      %v598 = vmax.f32 %v594, 0.0
      %v599 = vpack.c.bf16 %v597, %v595
      %v600 = vpack.c.bf16 %v598, %v596
      %v601 = vld [vmem:[%s4] sm:$0xf]
      %v602 = vld [vmem:[%s4 + $0x4] sm:$0xf]
      %v603 = vld [vmem:[%s4 + $0x8] sm:$0xf]
      %v604 = vld [vmem:[%s4 + $0xc] sm:$0xf]
      %v605 = vld [vmem:[%s4 + $0x10] sm:$0xf]
      %v606 = vld [vmem:[%s4 + $0x14] sm:$0xf]
      %v607 = vld [vmem:[%s4 + $0x18] sm:$0xf]
      %v608 = vld [vmem:[%s4 + $0x1c] sm:$0xf]
      %v609 = vld [vmem:[%s4 + $0x20] sm:$0xf]
      %v610 = vld [vmem:[%s4 + $0x24] sm:$0xf]
      %v611 = vld [vmem:[%s4 + $0x28] sm:$0xf]
      %v612 = vld [vmem:[%s4 + $0x2c] sm:$0xf]
      %v613 = vld [vmem:[%s4 + $0x30] sm:$0xf]
      %v614 = vld [vmem:[%s4 + $0x34] sm:$0xf]
      %v615 = vld [vmem:[%s4 + $0x38] sm:$0xf]
      %v616 = vld [vmem:[%s4 + $0x3c] sm:$0xf]
      %v617 = vld [vmem:[%s4 + $0x40] sm:$0xf]
      %v618 = vld [vmem:[%s4 + $0x44] sm:$0xf]
      %v619 = vld [vmem:[%s4 + $0x48] sm:$0xf]
      %v620 = vld [vmem:[%s4 + $0x4c] sm:$0xf]
      %v621 = vld [vmem:[%s4 + $0x50] sm:$0xf]
      %v622 = vld [vmem:[%s4 + $0x54] sm:$0xf]
      %v623 = vld [vmem:[%s4 + $0x58] sm:$0xf]
      %v624 = vld [vmem:[%s4 + $0x5c] sm:$0xf]
      %v625 = vld [vmem:[%s4 + $0x60] sm:$0xf]
      %v626 = vld [vmem:[%s4 + $0x64] sm:$0xf]
      %v627 = vld [vmem:[%s4 + $0x68] sm:$0xf]
      %v628 = vld [vmem:[%s4 + $0x6c] sm:$0xf]
      %v629 = vld [vmem:[%s4 + $0x70] sm:$0xf]
      %v630 = vld [vmem:[%s4 + $0x74] sm:$0xf]
      %v631 = vld [vmem:[%s4 + $0x78] sm:$0xf]
      %v632 = vld [vmem:[%s4 + $0x7c] sm:$0xf]
      %v665 = vunpack.c.l.b16 %v601
      %v666 = vunpack.c.l.b16 %v602
      %v667 = vunpack.c.l.b16 %v603
      %v668 = vunpack.c.l.b16 %v604
      %v669 = vunpack.c.l.b16 %v605
      %v670 = vunpack.c.l.b16 %v606
      %v671 = vunpack.c.l.b16 %v607
      %v672 = vunpack.c.l.b16 %v608
      %v673 = vunpack.c.l.b16 %v609
      %v674 = vunpack.c.l.b16 %v610
      %v675 = vunpack.c.l.b16 %v611
      %v676 = vunpack.c.l.b16 %v612
      %v677 = vunpack.c.l.b16 %v613
      %v678 = vunpack.c.l.b16 %v614
      %v679 = vunpack.c.l.b16 %v615
      %v680 = vunpack.c.l.b16 %v616
      %v681 = vunpack.c.l.b16 %v617
      %v682 = vunpack.c.l.b16 %v618
      %v683 = vunpack.c.l.b16 %v619
      %v684 = vunpack.c.l.b16 %v620
      %v685 = vunpack.c.l.b16 %v621
      %v686 = vunpack.c.l.b16 %v622
      %v687 = vunpack.c.l.b16 %v623
      %v688 = vunpack.c.l.b16 %v624
      %v689 = vunpack.c.l.b16 %v625
      %v690 = vunpack.c.l.b16 %v626
      %v691 = vunpack.c.l.b16 %v627
      %v692 = vunpack.c.l.b16 %v628
      %v693 = vunpack.c.l.b16 %v629
      %v694 = vunpack.c.l.b16 %v630
      %v695 = vunpack.c.l.b16 %v631
      %v696 = vunpack.c.l.b16 %v632
      %v697 = vpack.c.b16 %v666, %v665
      %v698 = vpack.c.b16 %v668, %v667
      %v699 = vpack.c.b16 %v670, %v669
      %v700 = vpack.c.b16 %v672, %v671
      %v701 = vpack.c.b16 %v674, %v673
      %v702 = vpack.c.b16 %v676, %v675
      %v703 = vpack.c.b16 %v678, %v677
      %v704 = vpack.c.b16 %v680, %v679
      %v705 = vpack.c.b16 %v682, %v681
      %v706 = vpack.c.b16 %v684, %v683
      %v707 = vpack.c.b16 %v686, %v685
      %v708 = vpack.c.b16 %v688, %v687
      %v709 = vpack.c.b16 %v690, %v689
      %v710 = vpack.c.b16 %v692, %v691
      %v711 = vpack.c.b16 %v694, %v693
      %v712 = vpack.c.b16 %v696, %v695
      %729 = vmatprep.subr.bf16.mxu0 0
      %730 = vmatpush1.bf16.msra.mxu0 %v704
      %731 = vmatprep.subr.bf16.mxu0 0
      %732 = vmatpush1.bf16.msra.mxu0 %v703
      %733 = vmatprep.subr.bf16.mxu0 0
      %734 = vmatpush1.bf16.msra.mxu0 %v702
      %735 = vmatprep.subr.bf16.mxu0 0
      %736 = vmatpush1.bf16.msra.mxu0 %v701
      %737 = vmatprep.subr.bf16.mxu0 0
      %738 = vmatpush1.bf16.msra.mxu0 %v700
      %739 = vmatprep.subr.bf16.mxu0 0
      %740 = vmatpush1.bf16.msra.mxu0 %v699
      %741 = vmatprep.subr.bf16.mxu0 0
      %742 = vmatpush1.bf16.msra.mxu0 %v698
      %743 = vmatprep.subr.bf16.mxu0 0
      %744 = vmatpush1.bf16.msra.mxu0 %v697
      %745 = vmatprep.subr.bf16.mxu0 0
      %746 = vmatpush2.bf16.msra.mxu0 %v712
      %747 = vmatprep.subr.bf16.mxu0 0
      %748 = vmatpush2.bf16.msra.mxu0 %v711
      %749 = vmatprep.subr.bf16.mxu0 0
      %750 = vmatpush2.bf16.msra.mxu0 %v710
      %751 = vmatprep.subr.bf16.mxu0 0
      %752 = vmatpush2.bf16.msra.mxu0 %v709
      %753 = vmatprep.subr.bf16.mxu0 0
      %754 = vmatpush2.bf16.msra.mxu0 %v708
      %755 = vmatprep.subr.bf16.mxu0 0
      %756 = vmatpush2.bf16.msra.mxu0 %v707
      %757 = vmatprep.subr.bf16.mxu0 0
      %758 = vmatpush2.bf16.msra.mxu0 %v706
      %759 = vmatprep.subr.bf16.mxu0 0
      %760 = vmatpush2.bf16.msra.mxu0 %v705
      %761 = vmatprep.mubr.bf16.mxu0 %v600
      %762 = vmatmul.mubr.bf16.gmra.mxu0 %v599
      %v763 = vpop.f32.mrf.mxu0
      %v764 = vadd.f32 0.0, %v763
      %v765 = vpop.f32.mrf.mxu0
      %v766 = vpop.f32.mrf.mxu0
      %v767 = vpop.f32.mrf.mxu0
      %768 = vdwg.mxu0
      %v769 = vld [vmem:[%s5] sm:$0xf]
      %v770 = vld [vmem:[%s5 + $0x4] sm:$0xf]
      %v771 = vld [vmem:[%s5 + $0x8] sm:$0xf]
      %v772 = vld [vmem:[%s5 + $0xc] sm:$0xf]
      %v773 = vld [vmem:[%s5 + $0x10] sm:$0xf]
      %v774 = vld [vmem:[%s5 + $0x14] sm:$0xf]
      %v775 = vld [vmem:[%s5 + $0x18] sm:$0xf]
      %v776 = vld [vmem:[%s5 + $0x1c] sm:$0xf]
      %v777 = vld [vmem:[%s5 + $0x20] sm:$0xf]
      %v778 = vld [vmem:[%s5 + $0x24] sm:$0xf]
      %v779 = vld [vmem:[%s5 + $0x28] sm:$0xf]
      %v780 = vld [vmem:[%s5 + $0x2c] sm:$0xf]
      %v781 = vld [vmem:[%s5 + $0x30] sm:$0xf]
      %v782 = vld [vmem:[%s5 + $0x34] sm:$0xf]
      %v783 = vld [vmem:[%s5 + $0x38] sm:$0xf]
      %v784 = vld [vmem:[%s5 + $0x3c] sm:$0xf]
      %v785 = vld [vmem:[%s5 + $0x40] sm:$0xf]
      %v786 = vld [vmem:[%s5 + $0x44] sm:$0xf]
      %v787 = vld [vmem:[%s5 + $0x48] sm:$0xf]
      %v788 = vld [vmem:[%s5 + $0x4c] sm:$0xf]
      %v789 = vld [vmem:[%s5 + $0x50] sm:$0xf]
      %v790 = vld [vmem:[%s5 + $0x54] sm:$0xf]
      %v791 = vld [vmem:[%s5 + $0x58] sm:$0xf]
      %v792 = vld [vmem:[%s5 + $0x5c] sm:$0xf]
      %v793 = vld [vmem:[%s5 + $0x60] sm:$0xf]
      %v794 = vld [vmem:[%s5 + $0x64] sm:$0xf]
      %v795 = vld [vmem:[%s5 + $0x68] sm:$0xf]
      %v796 = vld [vmem:[%s5 + $0x6c] sm:$0xf]
      %v797 = vld [vmem:[%s5 + $0x70] sm:$0xf]
      %v798 = vld [vmem:[%s5 + $0x74] sm:$0xf]
      %v799 = vld [vmem:[%s5 + $0x78] sm:$0xf]
      %v800 = vld [vmem:[%s5 + $0x7c] sm:$0xf]
      %v803 = vrot.slane %v599, 2
      %v804 = vrot.slane %v600, 2
      %v839 = vunpack.c.l.b16 %v769
      %v840 = vunpack.c.l.b16 %v770
      %v841 = vunpack.c.l.b16 %v771
      %v842 = vunpack.c.l.b16 %v772
      %v843 = vunpack.c.l.b16 %v773
      %v844 = vunpack.c.l.b16 %v774
      %v845 = vunpack.c.l.b16 %v775
      %v846 = vunpack.c.l.b16 %v776
      %v847 = vunpack.c.l.b16 %v777
      %v848 = vunpack.c.l.b16 %v778
      %v849 = vunpack.c.l.b16 %v779
      %v850 = vunpack.c.l.b16 %v780
      %v851 = vunpack.c.l.b16 %v781
      %v852 = vunpack.c.l.b16 %v782
      %v853 = vunpack.c.l.b16 %v783
      %v854 = vunpack.c.l.b16 %v784
      %v855 = vunpack.c.l.b16 %v785
      %v856 = vunpack.c.l.b16 %v786
      %v857 = vunpack.c.l.b16 %v787
      %v858 = vunpack.c.l.b16 %v788
      %v859 = vunpack.c.l.b16 %v789
      %v860 = vunpack.c.l.b16 %v790
      %v861 = vunpack.c.l.b16 %v791
      %v862 = vunpack.c.l.b16 %v792
      %v863 = vunpack.c.l.b16 %v793
      %v864 = vunpack.c.l.b16 %v794
      %v865 = vunpack.c.l.b16 %v795
      %v866 = vunpack.c.l.b16 %v796
      %v867 = vunpack.c.l.b16 %v797
      %v868 = vunpack.c.l.b16 %v798
      %v869 = vunpack.c.l.b16 %v799
      %v870 = vunpack.c.l.b16 %v800
      %v871 = vpack.c.b16 %v840, %v839
      %v872 = vpack.c.b16 %v842, %v841
      %v873 = vpack.c.b16 %v844, %v843
      %v874 = vpack.c.b16 %v846, %v845
      %v875 = vpack.c.b16 %v848, %v847
      %v876 = vpack.c.b16 %v850, %v849
      %v877 = vpack.c.b16 %v852, %v851
      %v878 = vpack.c.b16 %v854, %v853
      %v879 = vpack.c.b16 %v856, %v855
      %v880 = vpack.c.b16 %v858, %v857
      %v881 = vpack.c.b16 %v860, %v859
      %v882 = vpack.c.b16 %v862, %v861
      %v883 = vpack.c.b16 %v864, %v863
      %v884 = vpack.c.b16 %v866, %v865
      %v885 = vpack.c.b16 %v868, %v867
      %v886 = vpack.c.b16 %v870, %v869
      %903 = vmatprep.subr.bf16.mxu0 0
      %904 = vmatpush1.bf16.msra.mxu0 %v878
      %905 = vmatprep.subr.bf16.mxu0 0
      %906 = vmatpush1.bf16.msra.mxu0 %v877
      %907 = vmatprep.subr.bf16.mxu0 0
      %908 = vmatpush1.bf16.msra.mxu0 %v876
      %909 = vmatprep.subr.bf16.mxu0 0
      %910 = vmatpush1.bf16.msra.mxu0 %v875
      %911 = vmatprep.subr.bf16.mxu0 0
      %912 = vmatpush1.bf16.msra.mxu0 %v874
      %913 = vmatprep.subr.bf16.mxu0 0
      %914 = vmatpush1.bf16.msra.mxu0 %v873
      %915 = vmatprep.subr.bf16.mxu0 0
      %916 = vmatpush1.bf16.msra.mxu0 %v872
      %917 = vmatprep.subr.bf16.mxu0 0
      %918 = vmatpush1.bf16.msra.mxu0 %v871
      %919 = vmatprep.subr.bf16.mxu0 0
      %920 = vmatpush2.bf16.msra.mxu0 %v886
      %921 = vmatprep.subr.bf16.mxu0 0
      %922 = vmatpush2.bf16.msra.mxu0 %v885
      %923 = vmatprep.subr.bf16.mxu0 0
      %924 = vmatpush2.bf16.msra.mxu0 %v884
      %925 = vmatprep.subr.bf16.mxu0 0
      %926 = vmatpush2.bf16.msra.mxu0 %v883
      %927 = vmatprep.subr.bf16.mxu0 0
      %928 = vmatpush2.bf16.msra.mxu0 %v882
      %929 = vmatprep.subr.bf16.mxu0 0
      %930 = vmatpush2.bf16.msra.mxu0 %v881
      %931 = vmatprep.subr.bf16.mxu0 0
      %932 = vmatpush2.bf16.msra.mxu0 %v880
      %933 = vmatprep.subr.bf16.mxu0 0
      %934 = vmatpush2.bf16.msra.mxu0 %v879
      %935 = vmatprep.mubr.bf16.mxu0 %v804
      %936 = vmatmul.mubr.bf16.gmra.mxu0 %v803
      %v937 = vpop.f32.mrf.mxu0
      %v938 = vadd.f32 0.0, %v937
      %v939 = vpop.f32.mrf.mxu0
      %v940 = vpop.f32.mrf.mxu0
      %v941 = vpop.f32.mrf.mxu0
      %942 = vdwg.mxu0
      %v943 = vld [vmem:[%s6] sm:$0xf]
      %v944 = vld [vmem:[%s6 + $0x4] sm:$0xf]
      %v945 = vld [vmem:[%s6 + $0x8] sm:$0xf]
      %v946 = vld [vmem:[%s6 + $0xc] sm:$0xf]
      %v947 = vld [vmem:[%s6 + $0x10] sm:$0xf]
      %v948 = vld [vmem:[%s6 + $0x14] sm:$0xf]
      %v949 = vld [vmem:[%s6 + $0x18] sm:$0xf]
      %v950 = vld [vmem:[%s6 + $0x1c] sm:$0xf]
      %v951 = vld [vmem:[%s6 + $0x20] sm:$0xf]
      %v952 = vld [vmem:[%s6 + $0x24] sm:$0xf]
      %v953 = vld [vmem:[%s6 + $0x28] sm:$0xf]
      %v954 = vld [vmem:[%s6 + $0x2c] sm:$0xf]
      %v955 = vld [vmem:[%s6 + $0x30] sm:$0xf]
      %v956 = vld [vmem:[%s6 + $0x34] sm:$0xf]
      %v957 = vld [vmem:[%s6 + $0x38] sm:$0xf]
      %v958 = vld [vmem:[%s6 + $0x3c] sm:$0xf]
      %v959 = vld [vmem:[%s6 + $0x40] sm:$0xf]
      %v960 = vld [vmem:[%s6 + $0x44] sm:$0xf]
      %v961 = vld [vmem:[%s6 + $0x48] sm:$0xf]
      %v962 = vld [vmem:[%s6 + $0x4c] sm:$0xf]
      %v963 = vld [vmem:[%s6 + $0x50] sm:$0xf]
      %v964 = vld [vmem:[%s6 + $0x54] sm:$0xf]
      %v965 = vld [vmem:[%s6 + $0x58] sm:$0xf]
      %v966 = vld [vmem:[%s6 + $0x5c] sm:$0xf]
      %v967 = vld [vmem:[%s6 + $0x60] sm:$0xf]
      %v968 = vld [vmem:[%s6 + $0x64] sm:$0xf]
      %v969 = vld [vmem:[%s6 + $0x68] sm:$0xf]
      %v970 = vld [vmem:[%s6 + $0x6c] sm:$0xf]
      %v971 = vld [vmem:[%s6 + $0x70] sm:$0xf]
      %v972 = vld [vmem:[%s6 + $0x74] sm:$0xf]
      %v973 = vld [vmem:[%s6 + $0x78] sm:$0xf]
      %v974 = vld [vmem:[%s6 + $0x7c] sm:$0xf]
      %v975 = vrot.slane %v599, 4
      %v976 = vrot.slane %v600, 4
      %v1011 = vunpack.c.l.b16 %v943
      %v1012 = vunpack.c.l.b16 %v944
      %v1013 = vunpack.c.l.b16 %v945
      %v1014 = vunpack.c.l.b16 %v946
      %v1015 = vunpack.c.l.b16 %v947
      %v1016 = vunpack.c.l.b16 %v948
      %v1017 = vunpack.c.l.b16 %v949
      %v1018 = vunpack.c.l.b16 %v950
      %v1019 = vunpack.c.l.b16 %v951
      %v1020 = vunpack.c.l.b16 %v952
      %v1021 = vunpack.c.l.b16 %v953
      %v1022 = vunpack.c.l.b16 %v954
      %v1023 = vunpack.c.l.b16 %v955
      %v1024 = vunpack.c.l.b16 %v956
      %v1025 = vunpack.c.l.b16 %v957
      %v1026 = vunpack.c.l.b16 %v958
      %v1027 = vunpack.c.l.b16 %v959
      %v1028 = vunpack.c.l.b16 %v960
      %v1029 = vunpack.c.l.b16 %v961
      %v1030 = vunpack.c.l.b16 %v962
      %v1031 = vunpack.c.l.b16 %v963
      %v1032 = vunpack.c.l.b16 %v964
      %v1033 = vunpack.c.l.b16 %v965
      %v1034 = vunpack.c.l.b16 %v966
      %v1035 = vunpack.c.l.b16 %v967
      %v1036 = vunpack.c.l.b16 %v968
      %v1037 = vunpack.c.l.b16 %v969
      %v1038 = vunpack.c.l.b16 %v970
      %v1039 = vunpack.c.l.b16 %v971
      %v1040 = vunpack.c.l.b16 %v972
      %v1041 = vunpack.c.l.b16 %v973
      %v1042 = vunpack.c.l.b16 %v974
      %v1043 = vpack.c.b16 %v1012, %v1011
      %v1044 = vpack.c.b16 %v1014, %v1013
      %v1045 = vpack.c.b16 %v1016, %v1015
      %v1046 = vpack.c.b16 %v1018, %v1017
      %v1047 = vpack.c.b16 %v1020, %v1019
      %v1048 = vpack.c.b16 %v1022, %v1021
      %v1049 = vpack.c.b16 %v1024, %v1023
      %v1050 = vpack.c.b16 %v1026, %v1025
      %v1051 = vpack.c.b16 %v1028, %v1027
      %v1052 = vpack.c.b16 %v1030, %v1029
      %v1053 = vpack.c.b16 %v1032, %v1031
      %v1054 = vpack.c.b16 %v1034, %v1033
      %v1055 = vpack.c.b16 %v1036, %v1035
      %v1056 = vpack.c.b16 %v1038, %v1037
      %v1057 = vpack.c.b16 %v1040, %v1039
      %v1058 = vpack.c.b16 %v1042, %v1041
      %1075 = vmatprep.subr.bf16.mxu0 0
      %1076 = vmatpush1.bf16.msra.mxu0 %v1050
      %1077 = vmatprep.subr.bf16.mxu0 0
      %1078 = vmatpush1.bf16.msra.mxu0 %v1049
      %1079 = vmatprep.subr.bf16.mxu0 0
      %1080 = vmatpush1.bf16.msra.mxu0 %v1048
      %1081 = vmatprep.subr.bf16.mxu0 0
      %1082 = vmatpush1.bf16.msra.mxu0 %v1047
      %1083 = vmatprep.subr.bf16.mxu0 0
      %1084 = vmatpush1.bf16.msra.mxu0 %v1046
      %1085 = vmatprep.subr.bf16.mxu0 0
      %1086 = vmatpush1.bf16.msra.mxu0 %v1045
      %1087 = vmatprep.subr.bf16.mxu0 0
      %1088 = vmatpush1.bf16.msra.mxu0 %v1044
      %1089 = vmatprep.subr.bf16.mxu0 0
      %1090 = vmatpush1.bf16.msra.mxu0 %v1043
      %1091 = vmatprep.subr.bf16.mxu0 0
      %1092 = vmatpush2.bf16.msra.mxu0 %v1058
      %1093 = vmatprep.subr.bf16.mxu0 0
      %1094 = vmatpush2.bf16.msra.mxu0 %v1057
      %1095 = vmatprep.subr.bf16.mxu0 0
      %1096 = vmatpush2.bf16.msra.mxu0 %v1056
      %1097 = vmatprep.subr.bf16.mxu0 0
      %1098 = vmatpush2.bf16.msra.mxu0 %v1055
      %1099 = vmatprep.subr.bf16.mxu0 0
      %1100 = vmatpush2.bf16.msra.mxu0 %v1054
      %1101 = vmatprep.subr.bf16.mxu0 0
      %1102 = vmatpush2.bf16.msra.mxu0 %v1053
      %1103 = vmatprep.subr.bf16.mxu0 0
      %1104 = vmatpush2.bf16.msra.mxu0 %v1052
      %1105 = vmatprep.subr.bf16.mxu0 0
      %1106 = vmatpush2.bf16.msra.mxu0 %v1051
      %1107 = vmatprep.mubr.bf16.mxu0 %v976
      %1108 = vmatmul.mubr.bf16.gmra.mxu0 %v975
      %v1109 = vpop.f32.mrf.mxu0
      %v1110 = vadd.f32 0.0, %v1109
      %v1111 = vpop.f32.mrf.mxu0
      %v1112 = vpop.f32.mrf.mxu0
      %v1113 = vpop.f32.mrf.mxu0
      %1114 = vdwg.mxu0
      %v1115 = vld [vmem:[%s7] sm:$0xf]
      %v1116 = vld [vmem:[%s7 + $0x4] sm:$0xf]
      %v1117 = vld [vmem:[%s7 + $0x8] sm:$0xf]
      %v1118 = vld [vmem:[%s7 + $0xc] sm:$0xf]
      %v1119 = vld [vmem:[%s7 + $0x10] sm:$0xf]
      %v1120 = vld [vmem:[%s7 + $0x14] sm:$0xf]
      %v1121 = vld [vmem:[%s7 + $0x18] sm:$0xf]
      %v1122 = vld [vmem:[%s7 + $0x1c] sm:$0xf]
      %v1123 = vld [vmem:[%s7 + $0x20] sm:$0xf]
      %v1124 = vld [vmem:[%s7 + $0x24] sm:$0xf]
      %v1125 = vld [vmem:[%s7 + $0x28] sm:$0xf]
      %v1126 = vld [vmem:[%s7 + $0x2c] sm:$0xf]
      %v1127 = vld [vmem:[%s7 + $0x30] sm:$0xf]
      %v1128 = vld [vmem:[%s7 + $0x34] sm:$0xf]
      %v1129 = vld [vmem:[%s7 + $0x38] sm:$0xf]
      %v1130 = vld [vmem:[%s7 + $0x3c] sm:$0xf]
      %v1131 = vld [vmem:[%s7 + $0x40] sm:$0xf]
      %v1132 = vld [vmem:[%s7 + $0x44] sm:$0xf]
      %v1133 = vld [vmem:[%s7 + $0x48] sm:$0xf]
      %v1134 = vld [vmem:[%s7 + $0x4c] sm:$0xf]
      %v1135 = vld [vmem:[%s7 + $0x50] sm:$0xf]
      %v1136 = vld [vmem:[%s7 + $0x54] sm:$0xf]
      %v1137 = vld [vmem:[%s7 + $0x58] sm:$0xf]
      %v1138 = vld [vmem:[%s7 + $0x5c] sm:$0xf]
      %v1139 = vld [vmem:[%s7 + $0x60] sm:$0xf]
      %v1140 = vld [vmem:[%s7 + $0x64] sm:$0xf]
      %v1141 = vld [vmem:[%s7 + $0x68] sm:$0xf]
      %v1142 = vld [vmem:[%s7 + $0x6c] sm:$0xf]
      %v1143 = vld [vmem:[%s7 + $0x70] sm:$0xf]
      %v1144 = vld [vmem:[%s7 + $0x74] sm:$0xf]
      %v1145 = vld [vmem:[%s7 + $0x78] sm:$0xf]
      %v1146 = vld [vmem:[%s7 + $0x7c] sm:$0xf]
      %v1147 = vrot.slane %v599, 6
      %v1148 = vrot.slane %v600, 6
      %v1183 = vunpack.c.l.b16 %v1115
      %v1184 = vunpack.c.l.b16 %v1116
      %v1185 = vunpack.c.l.b16 %v1117
      %v1186 = vunpack.c.l.b16 %v1118
      %v1187 = vunpack.c.l.b16 %v1119
      %v1188 = vunpack.c.l.b16 %v1120
      %v1189 = vunpack.c.l.b16 %v1121
      %v1190 = vunpack.c.l.b16 %v1122
      %v1191 = vunpack.c.l.b16 %v1123
      %v1192 = vunpack.c.l.b16 %v1124
      %v1193 = vunpack.c.l.b16 %v1125
      %v1194 = vunpack.c.l.b16 %v1126
      %v1195 = vunpack.c.l.b16 %v1127
      %v1196 = vunpack.c.l.b16 %v1128
      %v1197 = vunpack.c.l.b16 %v1129
      %v1198 = vunpack.c.l.b16 %v1130
      %v1199 = vunpack.c.l.b16 %v1131
      %v1200 = vunpack.c.l.b16 %v1132
      %v1201 = vunpack.c.l.b16 %v1133
      %v1202 = vunpack.c.l.b16 %v1134
      %v1203 = vunpack.c.l.b16 %v1135
      %v1204 = vunpack.c.l.b16 %v1136
      %v1205 = vunpack.c.l.b16 %v1137
      %v1206 = vunpack.c.l.b16 %v1138
      %v1207 = vunpack.c.l.b16 %v1139
      %v1208 = vunpack.c.l.b16 %v1140
      %v1209 = vunpack.c.l.b16 %v1141
      %v1210 = vunpack.c.l.b16 %v1142
      %v1211 = vunpack.c.l.b16 %v1143
      %v1212 = vunpack.c.l.b16 %v1144
      %v1213 = vunpack.c.l.b16 %v1145
      %v1214 = vunpack.c.l.b16 %v1146
      %v1215 = vpack.c.b16 %v1184, %v1183
      %v1216 = vpack.c.b16 %v1186, %v1185
      %v1217 = vpack.c.b16 %v1188, %v1187
      %v1218 = vpack.c.b16 %v1190, %v1189
      %v1219 = vpack.c.b16 %v1192, %v1191
      %v1220 = vpack.c.b16 %v1194, %v1193
      %v1221 = vpack.c.b16 %v1196, %v1195
      %v1222 = vpack.c.b16 %v1198, %v1197
      %v1223 = vpack.c.b16 %v1200, %v1199
      %v1224 = vpack.c.b16 %v1202, %v1201
      %v1225 = vpack.c.b16 %v1204, %v1203
      %v1226 = vpack.c.b16 %v1206, %v1205
      %v1227 = vpack.c.b16 %v1208, %v1207
      %v1228 = vpack.c.b16 %v1210, %v1209
      %v1229 = vpack.c.b16 %v1212, %v1211
      %v1230 = vpack.c.b16 %v1214, %v1213
      %1247 = vmatprep.subr.bf16.mxu0 0
      %1248 = vmatpush1.bf16.msra.mxu0 %v1222
      %1249 = vmatprep.subr.bf16.mxu0 0
      %1250 = vmatpush1.bf16.msra.mxu0 %v1221
      %1251 = vmatprep.subr.bf16.mxu0 0
      %1252 = vmatpush1.bf16.msra.mxu0 %v1220
      %1253 = vmatprep.subr.bf16.mxu0 0
      %1254 = vmatpush1.bf16.msra.mxu0 %v1219
      %1255 = vmatprep.subr.bf16.mxu0 0
      %1256 = vmatpush1.bf16.msra.mxu0 %v1218
      %1257 = vmatprep.subr.bf16.mxu0 0
      %1258 = vmatpush1.bf16.msra.mxu0 %v1217
      %1259 = vmatprep.subr.bf16.mxu0 0
      %1260 = vmatpush1.bf16.msra.mxu0 %v1216
      %1261 = vmatprep.subr.bf16.mxu0 0
      %1262 = vmatpush1.bf16.msra.mxu0 %v1215
      %1263 = vmatprep.subr.bf16.mxu0 0
      %1264 = vmatpush2.bf16.msra.mxu0 %v1230
      %1265 = vmatprep.subr.bf16.mxu0 0
      %1266 = vmatpush2.bf16.msra.mxu0 %v1229
      %1267 = vmatprep.subr.bf16.mxu0 0
      %1268 = vmatpush2.bf16.msra.mxu0 %v1228
      %1269 = vmatprep.subr.bf16.mxu0 0
      %1270 = vmatpush2.bf16.msra.mxu0 %v1227
      %1271 = vmatprep.subr.bf16.mxu0 0
      %1272 = vmatpush2.bf16.msra.mxu0 %v1226
      %1273 = vmatprep.subr.bf16.mxu0 0
      %1274 = vmatpush2.bf16.msra.mxu0 %v1225
      %1275 = vmatprep.subr.bf16.mxu0 0
      %1276 = vmatpush2.bf16.msra.mxu0 %v1224
      %1277 = vmatprep.subr.bf16.mxu0 0
      %1278 = vmatpush2.bf16.msra.mxu0 %v1223
      %1279 = vmatprep.mubr.bf16.mxu0 %v1148
      %1280 = vmatmul.mubr.bf16.gmra.mxu0 %v1147
      %v1281 = vpop.f32.mrf.mxu0
      %v1282 = vadd.f32 0.0, %v1281
      %v1283 = vpop.f32.mrf.mxu0
      %v1284 = vpop.f32.mrf.mxu0
      %v1285 = vpop.f32.mrf.mxu0
      %1286 = vdwg.mxu0
      %v1288 = vrot.slane %v938, 4
      %v1291 = vrot.slane %v1282, 4
      %v1293 = vsel %vm513, %v764, %v1288
      %v1294 = vsel %vm513, %v1110, %v1291
      %v1295 = vlaneseq
      %v1296 = vand.u32 %v1295, 127
      %vm1297 = vcmp.eq.s32.totalorder %v1296, 0
      %1298 = vrot.lane.b32.xlu0 %v1293, 1
      %v1299 = vpop.permute.xlu0 %1298
      %1300 = vrot.lane.b32.xlu0 %v1294, 1
      %v1301 = vpop.permute.xlu0 %1300
      %v1302 = vsel %vm1297, 0.0, %v1299
      %v1303 = vsel %vm1297, 0.0, %v1301
      %vm1304 = vcmp.eq.s32.totalorder %v1296, 127
      %1305 = vrot.lane.b32.xlu0 %v1293, 127
      %v1306 = vpop.permute.xlu0 %1305
      %1307 = vrot.lane.b32.xlu0 %v1294, 127
      %v1308 = vpop.permute.xlu0 %1307
      %v1309 = vsel %vm1304, 0.0, %v1306
      %v1310 = vsel %vm1304, 0.0, %v1308
      %v1311 = vpack.c.bf16 %v1303, %v1302
      %v1312 = vpack.c.bf16 %v1294, %v1293
      %v1313 = vpack.c.bf16 %v1310, %v1309
      %v1314 = vld [vmem:[%s8] sm:$0xf]
      %v1315 = vld [vmem:[%s8 + $0x4] sm:$0xf]
      %v1318 = vunpack.c.l.b16 %v1314
      %v1319 = vunpack.c.l.b16 %v1315
      %v1320 = vpack.c.b16 %v1319, %v1318
      %vm1321 = vcmask 392192
      %v1323 = vsel %vm1321, %v1320, 0
      %1325 = vmatprep.subr.bf16.mxu0 0
      %1326 = vmatpush1.bf16.msra.mxu0 0
      %1327 = vmatprep.subr.bf16.mxu0 0
      %1328 = vmatpush1.bf16.msra.mxu0 0
      %1329 = vmatprep.subr.bf16.mxu0 0
      %1330 = vmatpush1.bf16.msra.mxu0 0
      %1331 = vmatprep.subr.bf16.mxu0 0
      %1332 = vmatpush1.bf16.msra.mxu0 0
      %1333 = vmatprep.subr.bf16.mxu0 0
      %1334 = vmatpush1.bf16.msra.mxu0 0
      %1335 = vmatprep.subr.bf16.mxu0 0
      %1336 = vmatpush1.bf16.msra.mxu0 %v1313
      %1337 = vmatprep.subr.bf16.mxu0 0
      %1338 = vmatpush1.bf16.msra.mxu0 %v1312
      %1339 = vmatprep.subr.bf16.mxu0 0
      %1340 = vmatpush1.bf16.msra.mxu0 %v1311
      %1341 = vmatprep.subr.bf16.mxu0 0
      %1342 = vmatpush2.bf16.msra.mxu0 0
      %1343 = vmatprep.subr.bf16.mxu0 0
      %1344 = vmatpush2.bf16.msra.mxu0 0
      %1345 = vmatprep.subr.bf16.mxu0 0
      %1346 = vmatpush2.bf16.msra.mxu0 0
      %1347 = vmatprep.subr.bf16.mxu0 0
      %1348 = vmatpush2.bf16.msra.mxu0 0
      %1349 = vmatprep.subr.bf16.mxu0 0
      %1350 = vmatpush2.bf16.msra.mxu0 0
      %1351 = vmatprep.subr.bf16.mxu0 0
      %1352 = vmatpush2.bf16.msra.mxu0 0
      %1353 = vmatprep.subr.bf16.mxu0 0
      %1354 = vmatpush2.bf16.msra.mxu0 0
      %1355 = vmatprep.subr.bf16.mxu0 0
      %1356 = vmatpush2.bf16.msra.mxu0 0
      %1357 = vmatprep.mubr.bf16.mxu0 0
      %1358 = vmatmul.mubr.bf16.gmra.mxu0 %v1323
      %v1359 = vpop.f32.mrf.mxu0
      %v1360 = vadd.f32 0.0, %v1359
      %v1361 = vpop.f32.mrf.mxu0
      %v1362 = vpop.f32.mrf.mxu0
      %v1363 = vadd.f32 0.0, %v1362
      %v1364 = vpop.f32.mrf.mxu0
      %1365 = vdwg.mxu0
      %v1366 = vld [vmem:[%s9] sm:$0xff]
      %v1367 = vld [vmem:[%s9 + $0x8] sm:$0xff]
      %1369 = vset.pattern.permute.xlu0 0
      %1370 = vperm.xlu0 %1369, %v1366
      %v1371 = vpop.permute.xlu0 %1370
      %1374 = vset.pattern.permute.xlu0 0
      %1375 = vperm.xlu0 %1374, %v1367
      %v1376 = vpop.permute.xlu0 %1375
      %v1378 = vmul.f32 %v1360, %v1371
      %v1379 = vmul.f32 %v1363, %v1376
      %v1380 = vld [vmem:[%s10] sm:$0xff]
      %v1381 = vld [vmem:[%s10 + $0x8] sm:$0xff]
      %1383 = vset.pattern.permute.xlu0 0
      %1384 = vperm.xlu0 %1383, %v1380
      %v1385 = vpop.permute.xlu0 %1384
      %1388 = vset.pattern.permute.xlu0 0
      %1389 = vperm.xlu0 %1388, %v1381
      %v1390 = vpop.permute.xlu0 %1389
      %v1392 = vadd.f32 %v1378, %v1385
      %v1393 = vadd.f32 %v1379, %v1390
      %v1394 = vmax.f32 %v1392, 0.0
      %v1395 = vmax.f32 %v1393, 0.0
      %v1396 = vld [vmem:[%s14] sm:$0xff]
      %v1397 = vld [vmem:[%s14 + $0x8] sm:$0xff]
      %v1398 = vmul.f32 %v1394, %v1396
      %v1399 = vmul.f32 %v1395, %v1397
      %1400 = vrot.lane.b32.xlu0 %v1398, 1
      %v1401 = vpop.permute.xlu0 %1400
      %1402 = vrot.lane.b32.xlu0 %v1399, 1
      %v1403 = vpop.permute.xlu0 %1402
      %v1404 = vsel %vm1297, 0.0, %v1401
      %v1405 = vsel %vm1297, 0.0, %v1403
      %1406 = vrot.lane.b32.xlu0 %v1398, 127
      %v1407 = vpop.permute.xlu0 %1406
      %1408 = vrot.lane.b32.xlu0 %v1399, 127
      %v1409 = vpop.permute.xlu0 %1408
      %v1410 = vsel %vm1304, 0.0, %v1407
      %v1411 = vsel %vm1304, 0.0, %v1409
      %v1412 = vpack.c.bf16 %v1405, %v1404
      %v1413 = vpack.c.bf16 %v1399, %v1398
      %v1414 = vpack.c.bf16 %v1411, %v1410
      %v1415 = vld [vmem:[%s11] sm:$0xf]
      %v1416 = vld [vmem:[%s11 + $0x4] sm:$0xf]
      %v1419 = vunpack.c.l.b16 %v1415
      %v1420 = vunpack.c.l.b16 %v1416
      %v1421 = vpack.c.b16 %v1420, %v1419
      %v1423 = vsel %vm1321, %v1421, 0
      %1425 = vmatprep.subr.bf16.mxu0 0
      %1426 = vmatpush1.bf16.msra.mxu0 0
      %1427 = vmatprep.subr.bf16.mxu0 0
      %1428 = vmatpush1.bf16.msra.mxu0 0
      %1429 = vmatprep.subr.bf16.mxu0 0
      %1430 = vmatpush1.bf16.msra.mxu0 0
      %1431 = vmatprep.subr.bf16.mxu0 0
      %1432 = vmatpush1.bf16.msra.mxu0 0
      %1433 = vmatprep.subr.bf16.mxu0 0
      %1434 = vmatpush1.bf16.msra.mxu0 0
      %1435 = vmatprep.subr.bf16.mxu0 0
      %1436 = vmatpush1.bf16.msra.mxu0 %v1414
      %1437 = vmatprep.subr.bf16.mxu0 0
      %1438 = vmatpush1.bf16.msra.mxu0 %v1413
      %1439 = vmatprep.subr.bf16.mxu0 0
      %1440 = vmatpush1.bf16.msra.mxu0 %v1412
      %1441 = vmatprep.subr.bf16.mxu0 0
      %1442 = vmatpush2.bf16.msra.mxu0 0
      %1443 = vmatprep.subr.bf16.mxu0 0
      %1444 = vmatpush2.bf16.msra.mxu0 0
      %1445 = vmatprep.subr.bf16.mxu0 0
      %1446 = vmatpush2.bf16.msra.mxu0 0
      %1447 = vmatprep.subr.bf16.mxu0 0
      %1448 = vmatpush2.bf16.msra.mxu0 0
      %1449 = vmatprep.subr.bf16.mxu0 0
      %1450 = vmatpush2.bf16.msra.mxu0 0
      %1451 = vmatprep.subr.bf16.mxu0 0
      %1452 = vmatpush2.bf16.msra.mxu0 0
      %1453 = vmatprep.subr.bf16.mxu0 0
      %1454 = vmatpush2.bf16.msra.mxu0 0
      %1455 = vmatprep.subr.bf16.mxu0 0
      %1456 = vmatpush2.bf16.msra.mxu0 0
      %1457 = vmatprep.mubr.bf16.mxu0 0
      %1458 = vmatmul.mubr.bf16.gmra.mxu0 %v1423
      %v1459 = vpop.f32.mrf.mxu0
      %v1460 = vadd.f32 0.0, %v1459
      %v1461 = vpop.f32.mrf.mxu0
      %v1462 = vpop.f32.mrf.mxu0
      %v1463 = vadd.f32 0.0, %v1462
      %v1464 = vpop.f32.mrf.mxu0
      %1465 = vdwg.mxu0
      %v1466 = vld [vmem:[%s12] sm:$0xff]
      %v1467 = vld [vmem:[%s12 + $0x8] sm:$0xff]
      %1469 = vset.pattern.permute.xlu0 0
      %1470 = vperm.xlu0 %1469, %v1466
      %v1471 = vpop.permute.xlu0 %1470
      %1474 = vset.pattern.permute.xlu0 0
      %1475 = vperm.xlu0 %1474, %v1467
      %v1476 = vpop.permute.xlu0 %1475
      %v1478 = vmul.f32 %v1460, %v1471
      %v1479 = vmul.f32 %v1463, %v1476
      %v1480 = vld [vmem:[%s13] sm:$0xff]
      %v1481 = vld [vmem:[%s13 + $0x8] sm:$0xff]
      %1483 = vset.pattern.permute.xlu0 0
      %1484 = vperm.xlu0 %1483, %v1480
      %v1485 = vpop.permute.xlu0 %1484
      %1488 = vset.pattern.permute.xlu0 0
      %1489 = vperm.xlu0 %1488, %v1481
      %v1490 = vpop.permute.xlu0 %1489
      %v1492 = vadd.f32 %v1478, %v1485
      %v1493 = vadd.f32 %v1479, %v1490
      %v1494 = vmax.f32 %v1492, 0.0
      %v1495 = vmax.f32 %v1493, 0.0
      %1496 = vst [vmem:[%s494] sm:$0xff] %v1494
      %1497 = vst [vmem:[%s494 + $0x8] sm:$0xff] %v1495
      %p1498 = scmp.lt.s32.totalorder %s26, 1
      %s1499 = scalar_select %p1498, %s26, 1
      %s1500 = smul.addr %s1499, 2
      %s1501 = smul.addr %s1500, 8
      %s1502 = scalar_lea.vmem %s15, %s1501
      // Predicated region
      $region81: #{pallas_forward.1} parent=79 // pred_check
        %p1503 = pneg %p364
      $region82: #{pallas_forward.1} parent=79 // pred_check_branch
        %1505 = sbr.rel (%p1503) target = $region84
      $region83: #{pallas_forward.1} parent=79 // pred_region
        _
      $region84: #{pallas_forward.1} parent=79 // pred_fallthru
        _
    $region80: #{pallas_forward.1} parent=5 // pred_fallthru
      _
    %p1506 = scmp.le.s32.totalorder 2, %s21
    // Predicated region
    $region85: #{pallas_forward.1} parent=5 // pred_check
      %p1507 = pneg %p1506
    $region86: #{pallas_forward.1} parent=5 // pred_check_branch
      %1509 = sbr.rel (%p1507) target = $region88
    $region87: #{pallas_forward.1} parent=5 // pred_region
      %s1510 = ssub.s32 %s21, 2
      // Predicated region
      $region89: #{pallas_forward.1} parent=87 // pred_check
        %p1511 = pneg %p370
      $region90: #{pallas_forward.1} parent=87 // pred_check_branch
        %1513 = sbr.rel (%p1511) target = $region92
      $region91: #{pallas_forward.1} parent=87 // pred_region
        %p1514 = scmp.lt.s32.totalorder %s27, 1
        %s1515 = scalar_select %p1514, %s27, 1
        %s1516 = smul.addr %s1515, 2
        %s1517 = smul.addr %s1516, 8
        %s1518 = scalar_lea.vmem %s15, %s1517
      $region92: #{pallas_forward.1} parent=87 // pred_fallthru
        _
    $region88: #{pallas_forward.1} parent=5 // pred_fallthru
      _
  $region6: #{pallas_forward.1} parent=0 // loop_footer
    %s25 = sadd.s32 1, %s21
  $region7: #{pallas_forward.1} parent=0 // loop_footer_branch
    %20 = sbr.rel target = $region3
  $region8: #{pallas_forward.1} parent=0 // loop_exit
    _

</llo_original>
